<compile_context>
chip_gen: v5e
topology: v5e:2x2
jax: 0.10.0
libtpu: 0.0.40
codegen_flags: <defaults>
</compile_context>

<pallas_src>
import functools

import jax
import jax.numpy as jnp
from jax.experimental import pallas as pl
from jax.experimental.pallas import tpu as pltpu

LEAKY_SLOPE = 0.2
BN_EPS = 1e-5
LANES = 128          # lane width; every weight block is padded to this (or 2x this)
N_LAYERS = 6         # Linear layers per MLP branch


def _prefers_wide_mxu():
    """True on chips with a 256x256 MXU (v6e / v7x) where 256-wide block-diagonal
    fusion of the sdf+decoder branches pays off; False on 128x128-MXU chips
    (<= v5e) where it would double MXU work with all-zero off-diagonal blocks."""
    try:
        kind = jax.devices()[0].device_kind.lower()
    except Exception:
        return True
    return not any(tag in kind for tag in ("v2", "v3", "v4", "v5"))


# ------------------------------ Pallas kernel -------------------------------

def _ae_kernel(x_ref, we_ref, wbr_ref, b_ref, out_ref, *,
               heaviside, reconstruction, fused_layout):
    x = x_ref[...]                                       # (batch, 128) f32

    def bn_lrelu(h):
        # Training-mode BatchNorm1d (biased batch stats, eps=1e-5); affine is
        # identity at construction and folded away.  mean and E[h^2] are two
        # independent sublane reductions -> shorter XLU dependency chain.
        inv_n = 1.0 / h.shape[0]
        mean = jnp.sum(h, axis=0, keepdims=True) * inv_n
        mean_sq = jnp.sum(h * h, axis=0, keepdims=True) * inv_n
        var = mean_sq - mean * mean
        h = (h - mean) * jax.lax.rsqrt(var + BN_EPS)
        return jnp.maximum(h, LEAKY_SLOPE * h)           # LeakyReLU(0.2)

    def mlp(h, w_ref, row0, col0, width, stride):
        # 6 Linear layers (blocks packed `stride` rows apart in w_ref); all but
        # the last are followed by BN + LeakyReLU.  Pre-BN biases are dropped
        # (exact under training-mode BN); terminal biases added by the caller.
        for i in range(N_LAYERS):
            r = row0 + i * stride
            w = w_ref[r:r + width, col0:col0 + width]    # static (width,width) slice
            h = jnp.dot(h, w, preferred_element_type=jnp.float32)
            if i < N_LAYERS - 1:
                h = bn_lrelu(h)
        return h

    # encoder (tau head folded into block 5 as an extra output column) -------
    enc_out = mlp(x, we_ref, 0, 0, LANES, LANES) + b_ref[0:1, :LANES]
    # enc_out lanes: [ z (latent_dim) | tau | 0 ... ]

    packed = enc_out
    if fused_layout and heaviside and reconstruction:
        # One 256-wide block-diagonal MLP runs sdf + decoder together (exact:
        # BN / LeakyReLU are per-column).  sdf input = enc_out + x (query pts
        # pre-placed at lanes latent_dim+1 .. latent_dim+2 of x); dec input = enc_out.
        h = jnp.concatenate([enc_out + x, enc_out], axis=1)          # (batch, 256)
        fo = mlp(h, wbr_ref, 0, 0, 2 * LANES, 2 * LANES) + b_ref[1:2, :]
        packed = packed + fo[:, :LANES] + fo[:, LANES:]              # fold halves
    else:
        if fused_layout:
            # use the 128x128 quadrants of the 256-wide block-diagonal slab
            sdf_args = (0, 0, LANES, 2 * LANES)
            dec_args = (LANES, LANES, LANES, 2 * LANES)
        else:
            # compact layout: 6 sdf blocks then 6 decoder blocks, 128 wide
            sdf_args = (0, 0, LANES, LANES)
            dec_args = (N_LAYERS * LANES, 0, LANES, LANES)
        if heaviside:
            packed = packed + mlp(enc_out + x, wbr_ref, *sdf_args) + b_ref[1:2, :LANES]
        if reconstruction:
            packed = packed + mlp(enc_out, wbr_ref, *dec_args) + b_ref[1:2, LANES:]

    out_ref[...] = packed                                # single lane-dense store


# ------------------------------ host wrapper --------------------------------

@functools.partial(
    jax.jit,
    static_argnames=("latent_dim", "recon_dim", "reconstruction", "heaviside",
                     "fused_layout"))
def ae_forward(x, w_enc, w_br, b_slab, *, latent_dim, recon_dim,
               reconstruction, heaviside, fused_layout):
    batch, input_dim = x.shape
    x = x.astype(jnp.float32)
    qlo = latent_dim + 1            # query-point lanes (sdf layer-0 q-rows live here)
    enc_lo = latent_dim + 3         # encoder-input lanes (enc layer-0 rows live here)
    x_slab = jnp.zeros((batch, LANES), jnp.float32)
    x_slab = x_slab.at[:, qlo:qlo + 2].set(x[:, :2])
    x_slab = x_slab.at[:, enc_lo:enc_lo + input_dim - 2].set(x[:, 2:])

    kernel = functools.partial(_ae_kernel, heaviside=heaviside,
                               reconstruction=reconstruction,
                               fused_layout=fused_layout)
    vmem = pl.BlockSpec(memory_space=pltpu.MemorySpace.VMEM)
    packed = pl.pallas_call(
        kernel,
        out_shape=jax.ShapeDtypeStruct((batch, LANES), jnp.float32),
        in_specs=[vmem, vmem, vmem, vmem],
        out_specs=vmem,
    )(x_slab, w_enc, w_br, b_slab)

    out = {"z": packed[:, :latent_dim],
           "tau_pred": packed[:, latent_dim:latent_dim + 1]}
    if heaviside:
        out["sdf_pred"] = packed[:, latent_dim + 1:latent_dim + 2]
    if reconstruction:
        out["x_reconstructed"] = packed[:, latent_dim + 2:latent_dim + 2 + recon_dim]
    return out


# --------------------------- parameter construction -------------------------

def xavier_uniform(key, fan_in, fan_out):
    bound = (6.0 / (fan_in + fan_out)) ** 0.5
    return jax.random.uniform(key, (fan_in, fan_out), jnp.float32, -bound, bound)


def init_mlp6(key, dims):
    """dims = [d_in, h1..h5, d_out]; weights Xavier-uniform, biases zero."""
    keys = jax.random.split(key, N_LAYERS)
    return [(xavier_uniform(keys[i], dims[i], dims[i + 1]),
             jnp.zeros((dims[i + 1],), jnp.float32)) for i in range(N_LAYERS)]


def _enc_block(i, enc, latent_dim, tau_latent_dim, tau_w, enc_lo):
    w, _ = enc[i]
    blk = jnp.zeros((LANES, LANES), jnp.float32)
    ro = enc_lo if i == 0 else 0
    blk = blk.at[ro:ro + w.shape[0], :w.shape[1]].set(w)
    if i == N_LAYERS - 1:
        # fold the tau head: extra output column at lane latent_dim
        blk = blk.at[:w.shape[0], latent_dim:latent_dim + 1].set(
            w[:, :tau_latent_dim] @ tau_w)
    return blk


def _sdf_block(i, sdf, latent_dim):
    w, _ = sdf[i]
    blk = jnp.zeros((LANES, LANES), jnp.float32)
    if i == 0:
        blk = blk.at[:latent_dim, :w.shape[1]].set(w[:latent_dim])          # z rows
        blk = blk.at[latent_dim + 1:latent_dim + 3, :w.shape[1]].set(w[latent_dim:])  # q rows
    elif i == N_LAYERS - 1:
        blk = blk.at[:w.shape[0], latent_dim + 1:latent_dim + 2].set(w)     # sdf column
    else:
        blk = blk.at[:w.shape[0], :w.shape[1]].set(w)
    return blk


def _dec_block(i, dec, latent_dim):
    w, _ = dec[i]
    blk = jnp.zeros((LANES, LANES), jnp.float32)
    if i == N_LAYERS - 1:
        blk = blk.at[:w.shape[0],
                     latent_dim + 2:latent_dim + 2 + w.shape[1]].set(w)     # recon cols
    else:
        blk = blk.at[:w.shape[0], :w.shape[1]].set(w)
    return blk


def pack_params(enc, sdf, dec, tau_w, tau_b, *, latent_dim, tau_latent_dim, fused):
    enc_lo = latent_dim + 3
    # encoder slab: 6 zero-padded 128x128 blocks, tau folded into block 5
    w_enc = jnp.concatenate(
        [_enc_block(i, enc, latent_dim, tau_latent_dim, tau_w, enc_lo)
         for i in range(N_LAYERS)], axis=0)                                 # (768, 128)

    sdf_blocks = [_sdf_block(i, sdf, latent_dim) for i in range(N_LAYERS)]
    dec_blocks = [_dec_block(i, dec, latent_dim) for i in range(N_LAYERS)]
    if fused:
        # 256-wide block-diagonal blocks: sdf at [0:128,0:128], dec at [128:,128:]
        fb = []
        for i in range(N_LAYERS):
            blk = jnp.zeros((2 * LANES, 2 * LANES), jnp.float32)
            blk = blk.at[:LANES, :LANES].set(sdf_blocks[i])
            blk = blk.at[LANES:, LANES:].set(dec_blocks[i])
            fb.append(blk)
        w_br = jnp.concatenate(fb, axis=0)                                  # (1536, 256)
    else:
        w_br = jnp.concatenate(sdf_blocks + dec_blocks, axis=0)             # (1536, 128)

    # bias slab (8, 256): only terminal-layer biases survive (pre-BN biases are
    # exactly cancelled by training-mode BN, and are zero at construction).
    b_enc5 = enc[-1][1]
    b_slab = jnp.zeros((8, 2 * LANES), jnp.float32)
    b_slab = b_slab.at[0, :latent_dim].set(b_enc5)
    b_slab = b_slab.at[0, latent_dim].set(
        (b_enc5[:tau_latent_dim] @ tau_w)[0] + tau_b[0])                    # folded tau bias
    b_slab = b_slab.at[1, latent_dim + 1].set(sdf[-1][1][0])                # sdf bias
    b_dec5 = dec[-1][1]
    b_slab = b_slab.at[1, LANES + latent_dim + 2:
                          LANES + latent_dim + 2 + b_dec5.shape[0]].set(b_dec5)
    return w_enc, w_br, b_slab


class AEPallas:
    def __init__(self, key, input_dim=4, latent_dim=2, hidden_dim=32,
                 tau_latent_dim=2, fuse_branches=None):
        assert 4 * hidden_dim <= LANES, "hidden_dim*4 must fit in 128 lanes"
        assert tau_latent_dim <= latent_dim
        assert latent_dim + 3 + (input_dim - 2) <= LANES
        self.input_dim = input_dim
        self.latent_dim = latent_dim
        self.tau_latent_dim = tau_latent_dim
        self.recon_dim = input_dim - 2
        self.fused = _prefers_wide_mxu() if fuse_branches is None else bool(fuse_branches)

        h = hidden_dim
        ke, kt, ks, kd = jax.random.split(key, 4)
        self.enc_params = init_mlp6(
            ke, [input_dim - 2, h, 2 * h, 4 * h, 2 * h, h, latent_dim])
        self.sdf_params = init_mlp6(
            ks, [latent_dim + 2, h, 2 * h, 4 * h, 2 * h, h, 1])
        self.dec_params = init_mlp6(
            kd, [latent_dim, h, 2 * h, 4 * h, 2 * h, h, input_dim - 2])
        self.tau_w = xavier_uniform(kt, tau_latent_dim, 1)
        self.tau_b = jnp.zeros((1,), jnp.float32)

        self.w_enc, self.w_br, self.b_slab = pack_params(
            self.enc_params, self.sdf_params, self.dec_params,
            self.tau_w, self.tau_b, latent_dim=latent_dim,
            tau_latent_dim=tau_latent_dim, fused=self.fused)

    def forward(self, x, reconstruction=False, Heaviside=True):
        return ae_forward(x, self.w_enc, self.w_br, self.b_slab,
                          latent_dim=self.latent_dim, recon_dim=self.recon_dim,
                          reconstruction=reconstruction, heaviside=Heaviside,
                          fused_layout=self.fused)


# ----------------------------- pure-JAX reference ---------------------------

def ref_mlp6(x, params):
    h = x.astype(jnp.float32)
    for (w, b) in params[:-1]:
        h = h @ w + b
        mean = jnp.mean(h, axis=0, keepdims=True)
        var = jnp.mean((h - mean) ** 2, axis=0, keepdims=True)
        h = (h - mean) / jnp.sqrt(var + BN_EPS)
        h = jnp.where(h >= 0.0, h, LEAKY_SLOPE * h)
    w, b = params[-1]
    return h @ w + b


def ref_forward(model, x, reconstruction=False, Heaviside=True):
    query_points = x[:, :2]
    z = ref_mlp6(x[:, 2:], model.enc_params)
    tau_pred = z[:, :model.tau_latent_dim] @ model.tau_w + model.tau_b
    out = {"tau_pred": tau_pred, "z": z}
    if reconstruction:
        out["x_reconstructed"] = ref_mlp6(z, model.dec_params)
    if Heaviside:
        out["sdf_pred"] = ref_mlp6(
            jnp.concatenate([z, query_points], axis=1), model.sdf_params)
    return out


# ----------------------------------- main ------------------------------------

if __name__ == "__main__":
    key = jax.random.PRNGKey(0)
    k_param, k_data = jax.random.split(key)

    batch = 8
    x = jax.random.normal(k_data, (batch, 4), dtype=jnp.float32)

    auto = _prefers_wide_mxu()
    final_out = None
    # exercise BOTH layouts: the auto-detected one for this chip and the other
    # (256-wide block-diagonal fused vs. compact 128-wide per-branch)
    for fuse in (auto, not auto):
        model = AEPallas(k_param, input_dim=4, latent_dim=2, hidden_dim=32,
                         tau_latent_dim=2, fuse_branches=fuse)
        ref = ref_forward(model, x, reconstruction=True, Heaviside=True)

        out = model.forward(x, reconstruction=True, Heaviside=True)
        jax.block_until_ready(out)
        for name in ("z", "tau_pred", "sdf_pred", "x_reconstructed"):
            assert jnp.allclose(out[name], ref[name], rtol=1e-4, atol=1e-4), (fuse, name)

        # single-branch path (quadrant / compact extraction)
        out_h = model.forward(x, reconstruction=False, Heaviside=True)
        jax.block_until_ready(out_h)
        for name in ("z", "tau_pred", "sdf_pred"):
            assert jnp.allclose(out_h[name], ref[name], rtol=1e-4, atol=1e-4), (fuse, name)

        if fuse == auto:
            final_out = out

    # shape sanity checks matching the PyTorch module
    assert final_out["z"].shape == (batch, 2)
    assert final_out["tau_pred"].shape == (batch, 1)
    assert final_out["sdf_pred"].shape == (batch, 1)
    assert final_out["x_reconstructed"].shape == (batch, 2)

    print("KERNEL_OK")
</pallas_src>

<mosaic_0001>
module attributes {stable_mosaic.version = 11 : i64} {
  func.func @_ae_kernel(%arg0: memref<8x128xf32, #tpu.memory_space<vmem>>, %arg1: memref<768x128xf32, #tpu.memory_space<vmem>>, %arg2: memref<1536x256xf32, #tpu.memory_space<vmem>>, %arg3: memref<8x256xf32, #tpu.memory_space<vmem>>, %arg4: memref<8x128xf32, #tpu.memory_space<vmem>>) attributes {dimension_semantics = [], scalar_prefetch = 0 : i64, scratch_operands = 0 : i64, tpu.core_type = #tpu.core_type<tc>} {
    %c0 = arith.constant 0 : index
    %c0_0 = arith.constant 0 : index
    %0 = vector.load %arg0[%c0, %c0_0] : memref<8x128xf32, #tpu.memory_space<vmem>>, vector<8x128xf32>
    %c0_1 = arith.constant 0 : index
    %c0_2 = arith.constant 0 : index
    %1 = vector.load %arg1[%c0_1, %c0_2] : memref<768x128xf32, #tpu.memory_space<vmem>>, vector<128x128xf32>
    %cst = arith.constant dense<0.000000e+00> : vector<8x128xf32>
    %2 = tpu.matmul %0, %1, %cst {dimension_numbers = #tpu.dot_dimension_numbers<[1], [0], [0], [1], [0, 0, 1, 1], [], []>} : vector<8x128xf32>, vector<128x128xf32>, vector<8x128xf32> -> vector<8x128xf32>
    %cst_3 = arith.constant dense<0.000000e+00> : vector<128xf32>
    %3 = vector.multi_reduction <add>, %2, %cst_3 [0] : vector<8x128xf32> to vector<128xf32>
    %4 = vector.shape_cast %3 : vector<128xf32> to vector<1x128xf32>
    %cst_4 = arith.constant 1.250000e-01 : f32
    %5 = vector.broadcast %cst_4 : f32 to vector<1x128xf32>
    %6 = arith.mulf %4, %5 : vector<1x128xf32>
    %7 = arith.mulf %2, %2 : vector<8x128xf32>
    %cst_5 = arith.constant dense<0.000000e+00> : vector<128xf32>
    %8 = vector.multi_reduction <add>, %7, %cst_5 [0] : vector<8x128xf32> to vector<128xf32>
    %9 = vector.shape_cast %8 : vector<128xf32> to vector<1x128xf32>
    %cst_6 = arith.constant 1.250000e-01 : f32
    %10 = vector.broadcast %cst_6 : f32 to vector<1x128xf32>
    %11 = arith.mulf %9, %10 : vector<1x128xf32>
    %12 = arith.mulf %6, %6 : vector<1x128xf32>
    %13 = arith.subf %11, %12 : vector<1x128xf32>
    %14 = vector.broadcast %6 : vector<1x128xf32> to vector<8x128xf32>
    %15 = arith.subf %2, %14 : vector<8x128xf32>
    %cst_7 = arith.constant 9.99999974E-6 : f32
    %16 = vector.broadcast %cst_7 : f32 to vector<1x128xf32>
    %17 = arith.addf %13, %16 : vector<1x128xf32>
    %18 = math.rsqrt %17 : vector<1x128xf32>
    %19 = vector.broadcast %18 : vector<1x128xf32> to vector<8x128xf32>
    %20 = arith.mulf %15, %19 : vector<8x128xf32>
    %cst_8 = arith.constant 2.000000e-01 : f32
    %21 = vector.broadcast %cst_8 : f32 to vector<8x128xf32>
    %22 = arith.mulf %21, %20 : vector<8x128xf32>
    %23 = arith.maximumf %20, %22 : vector<8x128xf32>
    %c128 = arith.constant 128 : index
    %c0_9 = arith.constant 0 : index
    %24 = vector.load %arg1[%c128, %c0_9] : memref<768x128xf32, #tpu.memory_space<vmem>>, vector<128x128xf32>
    %cst_10 = arith.constant dense<0.000000e+00> : vector<8x128xf32>
    %25 = tpu.matmul %23, %24, %cst_10 {dimension_numbers = #tpu.dot_dimension_numbers<[1], [0], [0], [1], [0, 0, 1, 1], [], []>} : vector<8x128xf32>, vector<128x128xf32>, vector<8x128xf32> -> vector<8x128xf32>
    %cst_11 = arith.constant dense<0.000000e+00> : vector<128xf32>
    %26 = vector.multi_reduction <add>, %25, %cst_11 [0] : vector<8x128xf32> to vector<128xf32>
    %27 = vector.shape_cast %26 : vector<128xf32> to vector<1x128xf32>
    %cst_12 = arith.constant 1.250000e-01 : f32
    %28 = vector.broadcast %cst_12 : f32 to vector<1x128xf32>
    %29 = arith.mulf %27, %28 : vector<1x128xf32>
    %30 = arith.mulf %25, %25 : vector<8x128xf32>
    %cst_13 = arith.constant dense<0.000000e+00> : vector<128xf32>
    %31 = vector.multi_reduction <add>, %30, %cst_13 [0] : vector<8x128xf32> to vector<128xf32>
    %32 = vector.shape_cast %31 : vector<128xf32> to vector<1x128xf32>
    %cst_14 = arith.constant 1.250000e-01 : f32
    %33 = vector.broadcast %cst_14 : f32 to vector<1x128xf32>
    %34 = arith.mulf %32, %33 : vector<1x128xf32>
    %35 = arith.mulf %29, %29 : vector<1x128xf32>
    %36 = arith.subf %34, %35 : vector<1x128xf32>
    %37 = vector.broadcast %29 : vector<1x128xf32> to vector<8x128xf32>
    %38 = arith.subf %25, %37 : vector<8x128xf32>
    %cst_15 = arith.constant 9.99999974E-6 : f32
    %39 = vector.broadcast %cst_15 : f32 to vector<1x128xf32>
    %40 = arith.addf %36, %39 : vector<1x128xf32>
    %41 = math.rsqrt %40 : vector<1x128xf32>
    %42 = vector.broadcast %41 : vector<1x128xf32> to vector<8x128xf32>
    %43 = arith.mulf %38, %42 : vector<8x128xf32>
    %cst_16 = arith.constant 2.000000e-01 : f32
    %44 = vector.broadcast %cst_16 : f32 to vector<8x128xf32>
    %45 = arith.mulf %44, %43 : vector<8x128xf32>
    %46 = arith.maximumf %43, %45 : vector<8x128xf32>
    %c256 = arith.constant 256 : index
    %c0_17 = arith.constant 0 : index
    %47 = vector.load %arg1[%c256, %c0_17] : memref<768x128xf32, #tpu.memory_space<vmem>>, vector<128x128xf32>
    %cst_18 = arith.constant dense<0.000000e+00> : vector<8x128xf32>
    %48 = tpu.matmul %46, %47, %cst_18 {dimension_numbers = #tpu.dot_dimension_numbers<[1], [0], [0], [1], [0, 0, 1, 1], [], []>} : vector<8x128xf32>, vector<128x128xf32>, vector<8x128xf32> -> vector<8x128xf32>
    %cst_19 = arith.constant dense<0.000000e+00> : vector<128xf32>
    %49 = vector.multi_reduction <add>, %48, %cst_19 [0] : vector<8x128xf32> to vector<128xf32>
    %50 = vector.shape_cast %49 : vector<128xf32> to vector<1x128xf32>
    %cst_20 = arith.constant 1.250000e-01 : f32
    %51 = vector.broadcast %cst_20 : f32 to vector<1x128xf32>
    %52 = arith.mulf %50, %51 : vector<1x128xf32>
    %53 = arith.mulf %48, %48 : vector<8x128xf32>
    %cst_21 = arith.constant dense<0.000000e+00> : vector<128xf32>
    %54 = vector.multi_reduction <add>, %53, %cst_21 [0] : vector<8x128xf32> to vector<128xf32>
    %55 = vector.shape_cast %54 : vector<128xf32> to vector<1x128xf32>
    %cst_22 = arith.constant 1.250000e-01 : f32
    %56 = vector.broadcast %cst_22 : f32 to vector<1x128xf32>
    %57 = arith.mulf %55, %56 : vector<1x128xf32>
    %58 = arith.mulf %52, %52 : vector<1x128xf32>
    %59 = arith.subf %57, %58 : vector<1x128xf32>
    %60 = vector.broadcast %52 : vector<1x128xf32> to vector<8x128xf32>
    %61 = arith.subf %48, %60 : vector<8x128xf32>
    %cst_23 = arith.constant 9.99999974E-6 : f32
    %62 = vector.broadcast %cst_23 : f32 to vector<1x128xf32>
    %63 = arith.addf %59, %62 : vector<1x128xf32>
    %64 = math.rsqrt %63 : vector<1x128xf32>
    %65 = vector.broadcast %64 : vector<1x128xf32> to vector<8x128xf32>
    %66 = arith.mulf %61, %65 : vector<8x128xf32>
    %cst_24 = arith.constant 2.000000e-01 : f32
    %67 = vector.broadcast %cst_24 : f32 to vector<8x128xf32>
    %68 = arith.mulf %67, %66 : vector<8x128xf32>
    %69 = arith.maximumf %66, %68 : vector<8x128xf32>
    %c384 = arith.constant 384 : index
    %c0_25 = arith.constant 0 : index
    %70 = vector.load %arg1[%c384, %c0_25] : memref<768x128xf32, #tpu.memory_space<vmem>>, vector<128x128xf32>
    %cst_26 = arith.constant dense<0.000000e+00> : vector<8x128xf32>
    %71 = tpu.matmul %69, %70, %cst_26 {dimension_numbers = #tpu.dot_dimension_numbers<[1], [0], [0], [1], [0, 0, 1, 1], [], []>} : vector<8x128xf32>, vector<128x128xf32>, vector<8x128xf32> -> vector<8x128xf32>
    %cst_27 = arith.constant dense<0.000000e+00> : vector<128xf32>
    %72 = vector.multi_reduction <add>, %71, %cst_27 [0] : vector<8x128xf32> to vector<128xf32>
    %73 = vector.shape_cast %72 : vector<128xf32> to vector<1x128xf32>
    %cst_28 = arith.constant 1.250000e-01 : f32
    %74 = vector.broadcast %cst_28 : f32 to vector<1x128xf32>
    %75 = arith.mulf %73, %74 : vector<1x128xf32>
    %76 = arith.mulf %71, %71 : vector<8x128xf32>
    %cst_29 = arith.constant dense<0.000000e+00> : vector<128xf32>
    %77 = vector.multi_reduction <add>, %76, %cst_29 [0] : vector<8x128xf32> to vector<128xf32>
    %78 = vector.shape_cast %77 : vector<128xf32> to vector<1x128xf32>
    %cst_30 = arith.constant 1.250000e-01 : f32
    %79 = vector.broadcast %cst_30 : f32 to vector<1x128xf32>
    %80 = arith.mulf %78, %79 : vector<1x128xf32>
    %81 = arith.mulf %75, %75 : vector<1x128xf32>
    %82 = arith.subf %80, %81 : vector<1x128xf32>
    %83 = vector.broadcast %75 : vector<1x128xf32> to vector<8x128xf32>
    %84 = arith.subf %71, %83 : vector<8x128xf32>
    %cst_31 = arith.constant 9.99999974E-6 : f32
    %85 = vector.broadcast %cst_31 : f32 to vector<1x128xf32>
    %86 = arith.addf %82, %85 : vector<1x128xf32>
    %87 = math.rsqrt %86 : vector<1x128xf32>
    %88 = vector.broadcast %87 : vector<1x128xf32> to vector<8x128xf32>
    %89 = arith.mulf %84, %88 : vector<8x128xf32>
    %cst_32 = arith.constant 2.000000e-01 : f32
    %90 = vector.broadcast %cst_32 : f32 to vector<8x128xf32>
    %91 = arith.mulf %90, %89 : vector<8x128xf32>
    %92 = arith.maximumf %89, %91 : vector<8x128xf32>
    %c512 = arith.constant 512 : index
    %c0_33 = arith.constant 0 : index
    %93 = vector.load %arg1[%c512, %c0_33] : memref<768x128xf32, #tpu.memory_space<vmem>>, vector<128x128xf32>
    %cst_34 = arith.constant dense<0.000000e+00> : vector<8x128xf32>
    %94 = tpu.matmul %92, %93, %cst_34 {dimension_numbers = #tpu.dot_dimension_numbers<[1], [0], [0], [1], [0, 0, 1, 1], [], []>} : vector<8x128xf32>, vector<128x128xf32>, vector<8x128xf32> -> vector<8x128xf32>
    %cst_35 = arith.constant dense<0.000000e+00> : vector<128xf32>
    %95 = vector.multi_reduction <add>, %94, %cst_35 [0] : vector<8x128xf32> to vector<128xf32>
    %96 = vector.shape_cast %95 : vector<128xf32> to vector<1x128xf32>
    %cst_36 = arith.constant 1.250000e-01 : f32
    %97 = vector.broadcast %cst_36 : f32 to vector<1x128xf32>
    %98 = arith.mulf %96, %97 : vector<1x128xf32>
    %99 = arith.mulf %94, %94 : vector<8x128xf32>
    %cst_37 = arith.constant dense<0.000000e+00> : vector<128xf32>
    %100 = vector.multi_reduction <add>, %99, %cst_37 [0] : vector<8x128xf32> to vector<128xf32>
    %101 = vector.shape_cast %100 : vector<128xf32> to vector<1x128xf32>
    %cst_38 = arith.constant 1.250000e-01 : f32
    %102 = vector.broadcast %cst_38 : f32 to vector<1x128xf32>
    %103 = arith.mulf %101, %102 : vector<1x128xf32>
    %104 = arith.mulf %98, %98 : vector<1x128xf32>
    %105 = arith.subf %103, %104 : vector<1x128xf32>
    %106 = vector.broadcast %98 : vector<1x128xf32> to vector<8x128xf32>
    %107 = arith.subf %94, %106 : vector<8x128xf32>
    %cst_39 = arith.constant 9.99999974E-6 : f32
    %108 = vector.broadcast %cst_39 : f32 to vector<1x128xf32>
    %109 = arith.addf %105, %108 : vector<1x128xf32>
    %110 = math.rsqrt %109 : vector<1x128xf32>
    %111 = vector.broadcast %110 : vector<1x128xf32> to vector<8x128xf32>
    %112 = arith.mulf %107, %111 : vector<8x128xf32>
    %cst_40 = arith.constant 2.000000e-01 : f32
    %113 = vector.broadcast %cst_40 : f32 to vector<8x128xf32>
    %114 = arith.mulf %113, %112 : vector<8x128xf32>
    %115 = arith.maximumf %112, %114 : vector<8x128xf32>
    %c640 = arith.constant 640 : index
    %c0_41 = arith.constant 0 : index
    %116 = vector.load %arg1[%c640, %c0_41] : memref<768x128xf32, #tpu.memory_space<vmem>>, vector<128x128xf32>
    %cst_42 = arith.constant dense<0.000000e+00> : vector<8x128xf32>
    %117 = tpu.matmul %115, %116, %cst_42 {dimension_numbers = #tpu.dot_dimension_numbers<[1], [0], [0], [1], [0, 0, 1, 1], [], []>} : vector<8x128xf32>, vector<128x128xf32>, vector<8x128xf32> -> vector<8x128xf32>
    %c0_43 = arith.constant 0 : index
    %c0_44 = arith.constant 0 : index
    %118 = vector.load %arg3[%c0_43, %c0_44] : memref<8x256xf32, #tpu.memory_space<vmem>>, vector<1x128xf32>
    %119 = vector.broadcast %118 : vector<1x128xf32> to vector<8x128xf32>
    %120 = arith.addf %117, %119 : vector<8x128xf32>
    %121 = arith.addf %120, %0 : vector<8x128xf32>
    %122 = tpu.concatenate %121, %120 in 1 : vector<8x128xf32>, vector<8x128xf32> -> vector<8x256xf32>
    %c0_45 = arith.constant 0 : index
    %c0_46 = arith.constant 0 : index
    %123 = vector.load %arg2[%c0_45, %c0_46] : memref<1536x256xf32, #tpu.memory_space<vmem>>, vector<256x256xf32>
    %cst_47 = arith.constant dense<0.000000e+00> : vector<8x256xf32>
    %124 = tpu.matmul %122, %123, %cst_47 {dimension_numbers = #tpu.dot_dimension_numbers<[1], [0], [0], [1], [0, 0, 1, 1], [], []>} : vector<8x256xf32>, vector<256x256xf32>, vector<8x256xf32> -> vector<8x256xf32>
    %cst_48 = arith.constant dense<0.000000e+00> : vector<256xf32>
    %125 = vector.multi_reduction <add>, %124, %cst_48 [0] : vector<8x256xf32> to vector<256xf32>
    %126 = vector.shape_cast %125 : vector<256xf32> to vector<1x256xf32>
    %cst_49 = arith.constant 1.250000e-01 : f32
    %127 = vector.broadcast %cst_49 : f32 to vector<1x256xf32>
    %128 = arith.mulf %126, %127 : vector<1x256xf32>
    %129 = arith.mulf %124, %124 : vector<8x256xf32>
    %cst_50 = arith.constant dense<0.000000e+00> : vector<256xf32>
    %130 = vector.multi_reduction <add>, %129, %cst_50 [0] : vector<8x256xf32> to vector<256xf32>
    %131 = vector.shape_cast %130 : vector<256xf32> to vector<1x256xf32>
    %cst_51 = arith.constant 1.250000e-01 : f32
    %132 = vector.broadcast %cst_51 : f32 to vector<1x256xf32>
    %133 = arith.mulf %131, %132 : vector<1x256xf32>
    %134 = arith.mulf %128, %128 : vector<1x256xf32>
    %135 = arith.subf %133, %134 : vector<1x256xf32>
    %136 = vector.broadcast %128 : vector<1x256xf32> to vector<8x256xf32>
    %137 = arith.subf %124, %136 : vector<8x256xf32>
    %cst_52 = arith.constant 9.99999974E-6 : f32
    %138 = vector.broadcast %cst_52 : f32 to vector<1x256xf32>
    %139 = arith.addf %135, %138 : vector<1x256xf32>
    %140 = math.rsqrt %139 : vector<1x256xf32>
    %141 = vector.broadcast %140 : vector<1x256xf32> to vector<8x256xf32>
    %142 = arith.mulf %137, %141 : vector<8x256xf32>
    %cst_53 = arith.constant 2.000000e-01 : f32
    %143 = vector.broadcast %cst_53 : f32 to vector<8x256xf32>
    %144 = arith.mulf %143, %142 : vector<8x256xf32>
    %145 = arith.maximumf %142, %144 : vector<8x256xf32>
    %c256_54 = arith.constant 256 : index
    %c0_55 = arith.constant 0 : index
    %146 = vector.load %arg2[%c256_54, %c0_55] : memref<1536x256xf32, #tpu.memory_space<vmem>>, vector<256x256xf32>
    %cst_56 = arith.constant dense<0.000000e+00> : vector<8x256xf32>
    %147 = tpu.matmul %145, %146, %cst_56 {dimension_numbers = #tpu.dot_dimension_numbers<[1], [0], [0], [1], [0, 0, 1, 1], [], []>} : vector<8x256xf32>, vector<256x256xf32>, vector<8x256xf32> -> vector<8x256xf32>
    %cst_57 = arith.constant dense<0.000000e+00> : vector<256xf32>
    %148 = vector.multi_reduction <add>, %147, %cst_57 [0] : vector<8x256xf32> to vector<256xf32>
    %149 = vector.shape_cast %148 : vector<256xf32> to vector<1x256xf32>
    %cst_58 = arith.constant 1.250000e-01 : f32
    %150 = vector.broadcast %cst_58 : f32 to vector<1x256xf32>
    %151 = arith.mulf %149, %150 : vector<1x256xf32>
    %152 = arith.mulf %147, %147 : vector<8x256xf32>
    %cst_59 = arith.constant dense<0.000000e+00> : vector<256xf32>
    %153 = vector.multi_reduction <add>, %152, %cst_59 [0] : vector<8x256xf32> to vector<256xf32>
    %154 = vector.shape_cast %153 : vector<256xf32> to vector<1x256xf32>
    %cst_60 = arith.constant 1.250000e-01 : f32
    %155 = vector.broadcast %cst_60 : f32 to vector<1x256xf32>
    %156 = arith.mulf %154, %155 : vector<1x256xf32>
    %157 = arith.mulf %151, %151 : vector<1x256xf32>
    %158 = arith.subf %156, %157 : vector<1x256xf32>
    %159 = vector.broadcast %151 : vector<1x256xf32> to vector<8x256xf32>
    %160 = arith.subf %147, %159 : vector<8x256xf32>
    %cst_61 = arith.constant 9.99999974E-6 : f32
    %161 = vector.broadcast %cst_61 : f32 to vector<1x256xf32>
    %162 = arith.addf %158, %161 : vector<1x256xf32>
    %163 = math.rsqrt %162 : vector<1x256xf32>
    %164 = vector.broadcast %163 : vector<1x256xf32> to vector<8x256xf32>
    %165 = arith.mulf %160, %164 : vector<8x256xf32>
    %cst_62 = arith.constant 2.000000e-01 : f32
    %166 = vector.broadcast %cst_62 : f32 to vector<8x256xf32>
    %167 = arith.mulf %166, %165 : vector<8x256xf32>
    %168 = arith.maximumf %165, %167 : vector<8x256xf32>
    %c512_63 = arith.constant 512 : index
    %c0_64 = arith.constant 0 : index
    %169 = vector.load %arg2[%c512_63, %c0_64] : memref<1536x256xf32, #tpu.memory_space<vmem>>, vector<256x256xf32>
    %cst_65 = arith.constant dense<0.000000e+00> : vector<8x256xf32>
    %170 = tpu.matmul %168, %169, %cst_65 {dimension_numbers = #tpu.dot_dimension_numbers<[1], [0], [0], [1], [0, 0, 1, 1], [], []>} : vector<8x256xf32>, vector<256x256xf32>, vector<8x256xf32> -> vector<8x256xf32>
    %cst_66 = arith.constant dense<0.000000e+00> : vector<256xf32>
    %171 = vector.multi_reduction <add>, %170, %cst_66 [0] : vector<8x256xf32> to vector<256xf32>
    %172 = vector.shape_cast %171 : vector<256xf32> to vector<1x256xf32>
    %cst_67 = arith.constant 1.250000e-01 : f32
    %173 = vector.broadcast %cst_67 : f32 to vector<1x256xf32>
    %174 = arith.mulf %172, %173 : vector<1x256xf32>
    %175 = arith.mulf %170, %170 : vector<8x256xf32>
    %cst_68 = arith.constant dense<0.000000e+00> : vector<256xf32>
    %176 = vector.multi_reduction <add>, %175, %cst_68 [0] : vector<8x256xf32> to vector<256xf32>
    %177 = vector.shape_cast %176 : vector<256xf32> to vector<1x256xf32>
    %cst_69 = arith.constant 1.250000e-01 : f32
    %178 = vector.broadcast %cst_69 : f32 to vector<1x256xf32>
    %179 = arith.mulf %177, %178 : vector<1x256xf32>
    %180 = arith.mulf %174, %174 : vector<1x256xf32>
    %181 = arith.subf %179, %180 : vector<1x256xf32>
    %182 = vector.broadcast %174 : vector<1x256xf32> to vector<8x256xf32>
    %183 = arith.subf %170, %182 : vector<8x256xf32>
    %cst_70 = arith.constant 9.99999974E-6 : f32
    %184 = vector.broadcast %cst_70 : f32 to vector<1x256xf32>
    %185 = arith.addf %181, %184 : vector<1x256xf32>
    %186 = math.rsqrt %185 : vector<1x256xf32>
    %187 = vector.broadcast %186 : vector<1x256xf32> to vector<8x256xf32>
    %188 = arith.mulf %183, %187 : vector<8x256xf32>
    %cst_71 = arith.constant 2.000000e-01 : f32
    %189 = vector.broadcast %cst_71 : f32 to vector<8x256xf32>
    %190 = arith.mulf %189, %188 : vector<8x256xf32>
    %191 = arith.maximumf %188, %190 : vector<8x256xf32>
    %c768 = arith.constant 768 : index
    %c0_72 = arith.constant 0 : index
    %192 = vector.load %arg2[%c768, %c0_72] : memref<1536x256xf32, #tpu.memory_space<vmem>>, vector<256x256xf32>
    %cst_73 = arith.constant dense<0.000000e+00> : vector<8x256xf32>
    %193 = tpu.matmul %191, %192, %cst_73 {dimension_numbers = #tpu.dot_dimension_numbers<[1], [0], [0], [1], [0, 0, 1, 1], [], []>} : vector<8x256xf32>, vector<256x256xf32>, vector<8x256xf32> -> vector<8x256xf32>
    %cst_74 = arith.constant dense<0.000000e+00> : vector<256xf32>
    %194 = vector.multi_reduction <add>, %193, %cst_74 [0] : vector<8x256xf32> to vector<256xf32>
    %195 = vector.shape_cast %194 : vector<256xf32> to vector<1x256xf32>
    %cst_75 = arith.constant 1.250000e-01 : f32
    %196 = vector.broadcast %cst_75 : f32 to vector<1x256xf32>
    %197 = arith.mulf %195, %196 : vector<1x256xf32>
    %198 = arith.mulf %193, %193 : vector<8x256xf32>
    %cst_76 = arith.constant dense<0.000000e+00> : vector<256xf32>
    %199 = vector.multi_reduction <add>, %198, %cst_76 [0] : vector<8x256xf32> to vector<256xf32>
    %200 = vector.shape_cast %199 : vector<256xf32> to vector<1x256xf32>
    %cst_77 = arith.constant 1.250000e-01 : f32
    %201 = vector.broadcast %cst_77 : f32 to vector<1x256xf32>
    %202 = arith.mulf %200, %201 : vector<1x256xf32>
    %203 = arith.mulf %197, %197 : vector<1x256xf32>
    %204 = arith.subf %202, %203 : vector<1x256xf32>
    %205 = vector.broadcast %197 : vector<1x256xf32> to vector<8x256xf32>
    %206 = arith.subf %193, %205 : vector<8x256xf32>
    %cst_78 = arith.constant 9.99999974E-6 : f32
    %207 = vector.broadcast %cst_78 : f32 to vector<1x256xf32>
    %208 = arith.addf %204, %207 : vector<1x256xf32>
    %209 = math.rsqrt %208 : vector<1x256xf32>
    %210 = vector.broadcast %209 : vector<1x256xf32> to vector<8x256xf32>
    %211 = arith.mulf %206, %210 : vector<8x256xf32>
    %cst_79 = arith.constant 2.000000e-01 : f32
    %212 = vector.broadcast %cst_79 : f32 to vector<8x256xf32>
    %213 = arith.mulf %212, %211 : vector<8x256xf32>
    %214 = arith.maximumf %211, %213 : vector<8x256xf32>
    %c1024 = arith.constant 1024 : index
    %c0_80 = arith.constant 0 : index
    %215 = vector.load %arg2[%c1024, %c0_80] : memref<1536x256xf32, #tpu.memory_space<vmem>>, vector<256x256xf32>
    %cst_81 = arith.constant dense<0.000000e+00> : vector<8x256xf32>
    %216 = tpu.matmul %214, %215, %cst_81 {dimension_numbers = #tpu.dot_dimension_numbers<[1], [0], [0], [1], [0, 0, 1, 1], [], []>} : vector<8x256xf32>, vector<256x256xf32>, vector<8x256xf32> -> vector<8x256xf32>
    %cst_82 = arith.constant dense<0.000000e+00> : vector<256xf32>
    %217 = vector.multi_reduction <add>, %216, %cst_82 [0] : vector<8x256xf32> to vector<256xf32>
    %218 = vector.shape_cast %217 : vector<256xf32> to vector<1x256xf32>
    %cst_83 = arith.constant 1.250000e-01 : f32
    %219 = vector.broadcast %cst_83 : f32 to vector<1x256xf32>
    %220 = arith.mulf %218, %219 : vector<1x256xf32>
    %221 = arith.mulf %216, %216 : vector<8x256xf32>
    %cst_84 = arith.constant dense<0.000000e+00> : vector<256xf32>
    %222 = vector.multi_reduction <add>, %221, %cst_84 [0] : vector<8x256xf32> to vector<256xf32>
    %223 = vector.shape_cast %222 : vector<256xf32> to vector<1x256xf32>
    %cst_85 = arith.constant 1.250000e-01 : f32
    %224 = vector.broadcast %cst_85 : f32 to vector<1x256xf32>
    %225 = arith.mulf %223, %224 : vector<1x256xf32>
    %226 = arith.mulf %220, %220 : vector<1x256xf32>
    %227 = arith.subf %225, %226 : vector<1x256xf32>
    %228 = vector.broadcast %220 : vector<1x256xf32> to vector<8x256xf32>
    %229 = arith.subf %216, %228 : vector<8x256xf32>
    %cst_86 = arith.constant 9.99999974E-6 : f32
    %230 = vector.broadcast %cst_86 : f32 to vector<1x256xf32>
    %231 = arith.addf %227, %230 : vector<1x256xf32>
    %232 = math.rsqrt %231 : vector<1x256xf32>
    %233 = vector.broadcast %232 : vector<1x256xf32> to vector<8x256xf32>
    %234 = arith.mulf %229, %233 : vector<8x256xf32>
    %cst_87 = arith.constant 2.000000e-01 : f32
    %235 = vector.broadcast %cst_87 : f32 to vector<8x256xf32>
    %236 = arith.mulf %235, %234 : vector<8x256xf32>
    %237 = arith.maximumf %234, %236 : vector<8x256xf32>
    %c1280 = arith.constant 1280 : index
    %c0_88 = arith.constant 0 : index
    %238 = vector.load %arg2[%c1280, %c0_88] : memref<1536x256xf32, #tpu.memory_space<vmem>>, vector<256x256xf32>
    %cst_89 = arith.constant dense<0.000000e+00> : vector<8x256xf32>
    %239 = tpu.matmul %237, %238, %cst_89 {dimension_numbers = #tpu.dot_dimension_numbers<[1], [0], [0], [1], [0, 0, 1, 1], [], []>} : vector<8x256xf32>, vector<256x256xf32>, vector<8x256xf32> -> vector<8x256xf32>
    %c1 = arith.constant 1 : index
    %c0_90 = arith.constant 0 : index
    %240 = vector.load %arg3[%c1, %c0_90] : memref<8x256xf32, #tpu.memory_space<vmem>>, vector<1x256xf32>
    %241 = vector.broadcast %240 : vector<1x256xf32> to vector<8x256xf32>
    %242 = arith.addf %239, %241 : vector<8x256xf32>
    %243 = vector.extract_strided_slice %242 {offsets = [0, 0], sizes = [8, 128], strides = [1, 1]} : vector<8x256xf32> to vector<8x128xf32>
    %244 = arith.addf %120, %243 : vector<8x128xf32>
    %245 = vector.extract_strided_slice %242 {offsets = [0, 128], sizes = [8, 128], strides = [1, 1]} : vector<8x256xf32> to vector<8x128xf32>
    %246 = arith.addf %244, %245 : vector<8x128xf32>
    %c0_91 = arith.constant 0 : index
    %c0_92 = arith.constant 0 : index
    %247 = vector.load %arg4[%c0_91, %c0_92] : memref<8x128xf32, #tpu.memory_space<vmem>>, vector<8x128xf32>
    tpu.vector_store %arg4[%c0_91, %c0_92], %246 {strides = array<i32>} : memref<8x128xf32, #tpu.memory_space<vmem>>, vector<8x128xf32>,
    return
  }
}

</mosaic_0001>

<llo_original>
// kernel: ae_forward.1
$region0: #{ae_forward.1}
  #allocation0 [shape = 'u32[]', space=smem, size = 0x4, offset = 0x4, fixed_abs, tag = 'smem constant byte address 0x4 - core index']
  #allocation1 [shape = 'u32[72,128]{1,0:T(1,128)}', space=vmem, size = 0x9000, scoped, tag = 'internal scratch']
  %s0 = inlined_call_operand.vmem [shape: f32[8,128], index: 0, kind: input, shape index: {}]
  %s1 = inlined_call_operand.hbm [shape: f32[768,128], index: 1, kind: input, shape index: {}]
  %s2 = inlined_call_operand.hbm [shape: f32[1536,256], index: 2, kind: input, shape index: {}]
  %s3 = inlined_call_operand.hbm [shape: f32[8,256], index: 3, kind: input, shape index: {}]
  %s4 = inlined_call_operand.vmem [shape: f32[8,128], index: 4, kind: output, shape index: {}]
  %s5 = sld [smem:[#allocation0]]
  $region38: #{ae_forward.1} parent=0
    _
  %s7 = ssub.s32 1, %s5
  %s8 = scalar_select 0, %s7, %s5
  $region1: #{ae_forward.1} parent=0
    #allocation2 [shape = 'u8[393216]{0}', space=vmem, size = 0x60000, scoped, tag = 'input window, operand 1, single buffered']
    #allocation3 [shape = 's32[1]{0}', space=sflag, size = 0x4, scoped, tag = 'scoped memory for ae_forward.1']
    #allocation4 [shape = 'u8[1572864]{0}', space=vmem, size = 0x180000, scoped, tag = 'input window, operand 2, single buffered']
    #allocation5 [shape = 's32[1]{0}', space=sflag, size = 0x4, scoped, tag = 'scoped memory for ae_forward.1']
    #allocation6 [shape = 'u8[8192]{0}', space=vmem, size = 0x2000, scoped, tag = 'input window, operand 3, single buffered']
    %9 = vsyncpa [#allocation3], 0
    %10 = vsyncpa [#allocation5], 0
    // Predicated region
    $region2: #{ae_forward.1} parent=1 // pred_check
      _
    $region3: #{ae_forward.1} parent=1 // pred_check_branch
      %12 = sbr.rel (0) target = $region5
    $region4: #{ae_forward.1} parent=1 // pred_region
      _
    $region5: #{ae_forward.1} parent=1 // pred_fallthru
      _
    // Predicated region
    $region6: #{ae_forward.1} parent=1 // pred_check
      _
    $region7: #{ae_forward.1} parent=1 // pred_check_branch
      %14 = sbr.rel (0) target = $region9
    $region8: #{ae_forward.1} parent=1 // pred_region
      %16 = vsyncadd [#allocation3], 0
      %s17 = sshll.u32 %s1, 4
      %s18 = int_to_ptr.hbm [resolvable:$true] %s17
      %s19 = sshll.u32 [#allocation2], 4
      %s20 = int_to_ptr.vmem [resolvable:$true] %s19
      %25 = dma.hbm_to_vmem [thread:$0]  %s18, 12288, %s20, [#allocation3], 128, 128, 8
    $region9: #{ae_forward.1} parent=1 // pred_fallthru
      _
    // Predicated region
    $region10: #{ae_forward.1} parent=1 // pred_check
      _
    $region11: #{ae_forward.1} parent=1 // pred_check_branch
      %27 = sbr.rel (0) target = $region13
    $region12: #{ae_forward.1} parent=1 // pred_region
      %29 = vsyncadd [#allocation5], 0
      %s30 = sshll.u32 %s2, 4
      %s31 = int_to_ptr.hbm [resolvable:$true] %s30
      %s32 = sshll.u32 [#allocation4], 4
      %s33 = int_to_ptr.vmem [resolvable:$true] %s32
      %38 = dma.hbm_to_vmem [thread:$0]  %s31, 49152, %s33, [#allocation5], 256, 256, 16
    $region13: #{ae_forward.1} parent=1 // pred_fallthru
      _
    // Predicated region
    $region14: #{ae_forward.1} parent=1 // pred_check
      _
    $region15: #{ae_forward.1} parent=1 // pred_check_branch
      %40 = sbr.rel (0) target = $region17
    $region16: #{ae_forward.1} parent=1 // pred_region
      %42 = vsyncadd [#allocation5], 0
      %s44 = sshll.u32 %s3, 4
      %s45 = int_to_ptr.hbm [resolvable:$true] %s44
      %s46 = sshll.u32 [#allocation6], 4
      %s47 = int_to_ptr.vmem [resolvable:$true] %s46
      %49 = dma.hbm_to_vmem [thread:$0]  %s45, 256, %s47, [#allocation5]
    $region17: #{ae_forward.1} parent=1 // pred_fallthru
      _
    // Predicated region
    $region18: #{ae_forward.1} parent=1 // pred_check
      _
    $region19: #{ae_forward.1} parent=1 // pred_check_branch
      %51 = sbr.rel (0) target = $region21
    $region20: #{ae_forward.1} parent=1 // pred_region
      %53 = dma.done [#allocation3], 12288
    $region21: #{ae_forward.1} parent=1 // pred_fallthru
      _
    // Predicated region
    $region22: #{ae_forward.1} parent=1 // pred_check
      _
    $region23: #{ae_forward.1} parent=1 // pred_check_branch
      %55 = sbr.rel (0) target = $region25
    $region24: #{ae_forward.1} parent=1 // pred_region
      %57 = dma.done [#allocation5], 49152
    $region25: #{ae_forward.1} parent=1 // pred_fallthru
      _
    // Predicated region
    $region26: #{ae_forward.1} parent=1 // pred_check
      _
    $region27: #{ae_forward.1} parent=1 // pred_check_branch
      %59 = sbr.rel (0) target = $region29
    $region28: #{ae_forward.1} parent=1 // pred_region
      %61 = dma.done [#allocation5], 256
    $region29: #{ae_forward.1} parent=1 // pred_fallthru
      _
    %v62 = vld [vmem:[%s0] sm:$0xff]
    %v63 = vld [vmem:[#allocation2] sm:$0xff]
    %v64 = vld [vmem:[#allocation2 + $0x8] sm:$0xff]
    %v65 = vld [vmem:[#allocation2 + $0x10] sm:$0xff]
    %v66 = vld [vmem:[#allocation2 + $0x18] sm:$0xff]
    %v67 = vld [vmem:[#allocation2 + $0x20] sm:$0xff]
    %v68 = vld [vmem:[#allocation2 + $0x28] sm:$0xff]
    %v69 = vld [vmem:[#allocation2 + $0x30] sm:$0xff]
    %v70 = vld [vmem:[#allocation2 + $0x38] sm:$0xff]
    %v71 = vld [vmem:[#allocation2 + $0x40] sm:$0xff]
    %v72 = vld [vmem:[#allocation2 + $0x48] sm:$0xff]
    %v73 = vld [vmem:[#allocation2 + $0x50] sm:$0xff]
    %v74 = vld [vmem:[#allocation2 + $0x58] sm:$0xff]
    %v75 = vld [vmem:[#allocation2 + $0x60] sm:$0xff]
    %v76 = vld [vmem:[#allocation2 + $0x68] sm:$0xff]
    %v77 = vld [vmem:[#allocation2 + $0x70] sm:$0xff]
    %v78 = vld [vmem:[#allocation2 + $0x78] sm:$0xff]
    %79 = vmatpush.msra.mxu0 %v78
    %80 = vmatpush.msra.mxu0 %v77
    %81 = vmatpush.msra.mxu0 %v76
    %82 = vmatpush.msra.mxu0 %v75
    %83 = vmatpush.msra.mxu0 %v74
    %84 = vmatpush.msra.mxu0 %v73
    %85 = vmatpush.msra.mxu0 %v72
    %86 = vmatpush.msra.mxu0 %v71
    %87 = vmatpush.msra.mxu0 %v70
    %88 = vmatpush.msra.mxu0 %v69
    %89 = vmatpush.msra.mxu0 %v68
    %90 = vmatpush.msra.mxu0 %v67
    %91 = vmatpush.msra.mxu0 %v66
    %92 = vmatpush.msra.mxu0 %v65
    %93 = vmatpush.msra.mxu0 %v64
    %94 = vmatpush.msra.mxu0 %v63
    %95 = vmatmul.f32.gmra.mxu0 %v62
    %v96 = vpop.f32.mrf.mxu0
    %v97 = vadd.f32 0.0, %v96
    %98 = vdwg.mxu0
    %v99 = vrot.slane %v97, 4
    %v100 = vadd.f32 %v97, %v99
    %v101 = vrot.slane %v100, 2
    %v102 = vadd.f32 %v100, %v101
    %v103 = vrot.slane %v102, 1
    %v104 = vadd.f32 %v102, %v103
    %v105 = vmul.f32 %v104, 0.125
    %v106 = vmul.f32 %v97, %v97
    %v107 = vrot.slane %v106, 4
    %v108 = vadd.f32 %v106, %v107
    %v109 = vrot.slane %v108, 2
    %v110 = vadd.f32 %v108, %v109
    %v111 = vrot.slane %v110, 1
    %v112 = vadd.f32 %v110, %v111
    %v113 = vmul.f32 %v112, 0.125
    %v114 = vmul.f32 %v105, %v105
    %v115 = vsub.f32 %v113, %v114
    %v116 = vsub.f32 %v97, %v105
    %v117 = vadd.f32 %v115, 1e-05
    %v118 = vrsqrt.pop %v117
    %v119 = vmul.f32 %v118, %v117
    %v120 = vmul.f32 %v119, %v118
    %v121 = vmul.f32 0.5, %v120
    %v122 = vsub.f32 1.5, %v121
    %v123 = vmul.f32 %v118, %v122
    %vm124 = vweird.f32 %v117
    %vm125 = vweird.f32 %v118
    %vm126 = vmor %vm124, %vm125
    %v127 = vsel %vm126, %v118, %v123
    %v128 = vmul.f32 %v116, %v127
    %v129 = vmul.f32 %v128, 0.2
    %v130 = vmax.f32 %v128, %v129
    %v131 = vld [vmem:[#allocation2 + $0x80] sm:$0xff]
    %v132 = vld [vmem:[#allocation2 + $0x88] sm:$0xff]
    %v133 = vld [vmem:[#allocation2 + $0x90] sm:$0xff]
    %v134 = vld [vmem:[#allocation2 + $0x98] sm:$0xff]
    %v135 = vld [vmem:[#allocation2 + $0xa0] sm:$0xff]
    %v136 = vld [vmem:[#allocation2 + $0xa8] sm:$0xff]
    %v137 = vld [vmem:[#allocation2 + $0xb0] sm:$0xff]
    %v138 = vld [vmem:[#allocation2 + $0xb8] sm:$0xff]
    %v139 = vld [vmem:[#allocation2 + $0xc0] sm:$0xff]
    %v140 = vld [vmem:[#allocation2 + $0xc8] sm:$0xff]
    %v141 = vld [vmem:[#allocation2 + $0xd0] sm:$0xff]
    %v142 = vld [vmem:[#allocation2 + $0xd8] sm:$0xff]
    %v143 = vld [vmem:[#allocation2 + $0xe0] sm:$0xff]
    %v144 = vld [vmem:[#allocation2 + $0xe8] sm:$0xff]
    %v145 = vld [vmem:[#allocation2 + $0xf0] sm:$0xff]
    %v146 = vld [vmem:[#allocation2 + $0xf8] sm:$0xff]
    %147 = vmatpush.msra.mxu0 %v146
    %148 = vmatpush.msra.mxu0 %v145
    %149 = vmatpush.msra.mxu0 %v144
    %150 = vmatpush.msra.mxu0 %v143
    %151 = vmatpush.msra.mxu0 %v142
    %152 = vmatpush.msra.mxu0 %v141
    %153 = vmatpush.msra.mxu0 %v140
    %154 = vmatpush.msra.mxu0 %v139
    %155 = vmatpush.msra.mxu0 %v138
    %156 = vmatpush.msra.mxu0 %v137
    %157 = vmatpush.msra.mxu0 %v136
    %158 = vmatpush.msra.mxu0 %v135
    %159 = vmatpush.msra.mxu0 %v134
    %160 = vmatpush.msra.mxu0 %v133
    %161 = vmatpush.msra.mxu0 %v132
    %162 = vmatpush.msra.mxu0 %v131
    %163 = vmatmul.f32.gmra.mxu0 %v130
    %v164 = vpop.f32.mrf.mxu0
    %v165 = vadd.f32 0.0, %v164
    %166 = vdwg.mxu0
    %v167 = vrot.slane %v165, 4
    %v168 = vadd.f32 %v165, %v167
    %v169 = vrot.slane %v168, 2
    %v170 = vadd.f32 %v168, %v169
    %v171 = vrot.slane %v170, 1
    %v172 = vadd.f32 %v170, %v171
    %v173 = vmul.f32 %v172, 0.125
    %v174 = vmul.f32 %v165, %v165
    %v175 = vrot.slane %v174, 4
    %v176 = vadd.f32 %v174, %v175
    %v177 = vrot.slane %v176, 2
    %v178 = vadd.f32 %v176, %v177
    %v179 = vrot.slane %v178, 1
    %v180 = vadd.f32 %v178, %v179
    %v181 = vmul.f32 %v180, 0.125
    %v182 = vmul.f32 %v173, %v173
    %v183 = vsub.f32 %v181, %v182
    %v184 = vsub.f32 %v165, %v173
    %v185 = vadd.f32 %v183, 1e-05
    %v186 = vrsqrt.pop %v185
    %v187 = vmul.f32 %v186, %v185
    %v188 = vmul.f32 %v187, %v186
    %v189 = vmul.f32 0.5, %v188
    %v190 = vsub.f32 1.5, %v189
    %v191 = vmul.f32 %v186, %v190
    %vm192 = vweird.f32 %v185
    %vm193 = vweird.f32 %v186
    %vm194 = vmor %vm192, %vm193
    %v195 = vsel %vm194, %v186, %v191
    %v196 = vmul.f32 %v184, %v195
    %v197 = vmul.f32 %v196, 0.2
    %v198 = vmax.f32 %v196, %v197
    %v199 = vld [vmem:[#allocation2 + $0x100] sm:$0xff]
    %v200 = vld [vmem:[#allocation2 + $0x108] sm:$0xff]
    %v201 = vld [vmem:[#allocation2 + $0x110] sm:$0xff]
    %v202 = vld [vmem:[#allocation2 + $0x118] sm:$0xff]
    %v203 = vld [vmem:[#allocation2 + $0x120] sm:$0xff]
    %v204 = vld [vmem:[#allocation2 + $0x128] sm:$0xff]
    %v205 = vld [vmem:[#allocation2 + $0x130] sm:$0xff]
    %v206 = vld [vmem:[#allocation2 + $0x138] sm:$0xff]
    %v207 = vld [vmem:[#allocation2 + $0x140] sm:$0xff]
    %v208 = vld [vmem:[#allocation2 + $0x148] sm:$0xff]
    %v209 = vld [vmem:[#allocation2 + $0x150] sm:$0xff]
    %v210 = vld [vmem:[#allocation2 + $0x158] sm:$0xff]
    %v211 = vld [vmem:[#allocation2 + $0x160] sm:$0xff]
    %v212 = vld [vmem:[#allocation2 + $0x168] sm:$0xff]
    %v213 = vld [vmem:[#allocation2 + $0x170] sm:$0xff]
    %v214 = vld [vmem:[#allocation2 + $0x178] sm:$0xff]
    %215 = vmatpush.msra.mxu0 %v214
    %216 = vmatpush.msra.mxu0 %v213
    %217 = vmatpush.msra.mxu0 %v212
    %218 = vmatpush.msra.mxu0 %v211
    %219 = vmatpush.msra.mxu0 %v210
    %220 = vmatpush.msra.mxu0 %v209
    %221 = vmatpush.msra.mxu0 %v208
    %222 = vmatpush.msra.mxu0 %v207
    %223 = vmatpush.msra.mxu0 %v206
    %224 = vmatpush.msra.mxu0 %v205
    %225 = vmatpush.msra.mxu0 %v204
    %226 = vmatpush.msra.mxu0 %v203
    %227 = vmatpush.msra.mxu0 %v202
    %228 = vmatpush.msra.mxu0 %v201
    %229 = vmatpush.msra.mxu0 %v200
    %230 = vmatpush.msra.mxu0 %v199
    %231 = vmatmul.f32.gmra.mxu0 %v198
    %v232 = vpop.f32.mrf.mxu0
    %v233 = vadd.f32 0.0, %v232
    %234 = vdwg.mxu0
    %v235 = vrot.slane %v233, 4
    %v236 = vadd.f32 %v233, %v235
    %v237 = vrot.slane %v236, 2
    %v238 = vadd.f32 %v236, %v237
    %v239 = vrot.slane %v238, 1
    %v240 = vadd.f32 %v238, %v239
    %v241 = vmul.f32 %v240, 0.125
    %v242 = vmul.f32 %v233, %v233
    %v243 = vrot.slane %v242, 4
    %v244 = vadd.f32 %v242, %v243
    %v245 = vrot.slane %v244, 2
    %v246 = vadd.f32 %v244, %v245
    %v247 = vrot.slane %v246, 1
    %v248 = vadd.f32 %v246, %v247
    %v249 = vmul.f32 %v248, 0.125
    %v250 = vmul.f32 %v241, %v241
    %v251 = vsub.f32 %v249, %v250
    %v252 = vsub.f32 %v233, %v241
    %v253 = vadd.f32 %v251, 1e-05
    %v254 = vrsqrt.pop %v253
    %v255 = vmul.f32 %v254, %v253
    %v256 = vmul.f32 %v255, %v254
    %v257 = vmul.f32 0.5, %v256
    %v258 = vsub.f32 1.5, %v257
    %v259 = vmul.f32 %v254, %v258
    %vm260 = vweird.f32 %v253
    %vm261 = vweird.f32 %v254
    %vm262 = vmor %vm260, %vm261
    %v263 = vsel %vm262, %v254, %v259
    %v264 = vmul.f32 %v252, %v263
    %v265 = vmul.f32 %v264, 0.2
    %v266 = vmax.f32 %v264, %v265
    %v267 = vld [vmem:[#allocation2 + $0x180] sm:$0xff]
    %v268 = vld [vmem:[#allocation2 + $0x188] sm:$0xff]
    %v269 = vld [vmem:[#allocation2 + $0x190] sm:$0xff]
    %v270 = vld [vmem:[#allocation2 + $0x198] sm:$0xff]
    %v271 = vld [vmem:[#allocation2 + $0x1a0] sm:$0xff]
    %v272 = vld [vmem:[#allocation2 + $0x1a8] sm:$0xff]
    %v273 = vld [vmem:[#allocation2 + $0x1b0] sm:$0xff]
    %v274 = vld [vmem:[#allocation2 + $0x1b8] sm:$0xff]
    %v275 = vld [vmem:[#allocation2 + $0x1c0] sm:$0xff]
    %v276 = vld [vmem:[#allocation2 + $0x1c8] sm:$0xff]
    %v277 = vld [vmem:[#allocation2 + $0x1d0] sm:$0xff]
    %v278 = vld [vmem:[#allocation2 + $0x1d8] sm:$0xff]
    %v279 = vld [vmem:[#allocation2 + $0x1e0] sm:$0xff]
    %v280 = vld [vmem:[#allocation2 + $0x1e8] sm:$0xff]
    %v281 = vld [vmem:[#allocation2 + $0x1f0] sm:$0xff]
    %v282 = vld [vmem:[#allocation2 + $0x1f8] sm:$0xff]
    %283 = vmatpush.msra.mxu0 %v282
    %284 = vmatpush.msra.mxu0 %v281
    %285 = vmatpush.msra.mxu0 %v280
    %286 = vmatpush.msra.mxu0 %v279
    %287 = vmatpush.msra.mxu0 %v278
    %288 = vmatpush.msra.mxu0 %v277
    %289 = vmatpush.msra.mxu0 %v276
    %290 = vmatpush.msra.mxu0 %v275
    %291 = vmatpush.msra.mxu0 %v274
    %292 = vmatpush.msra.mxu0 %v273
    %293 = vmatpush.msra.mxu0 %v272
    %294 = vmatpush.msra.mxu0 %v271
    %295 = vmatpush.msra.mxu0 %v270
    %296 = vmatpush.msra.mxu0 %v269
    %297 = vmatpush.msra.mxu0 %v268
    %298 = vmatpush.msra.mxu0 %v267
    %299 = vmatmul.f32.gmra.mxu0 %v266
    %v300 = vpop.f32.mrf.mxu0
    %v301 = vadd.f32 0.0, %v300
    %302 = vdwg.mxu0
    %v303 = vrot.slane %v301, 4
    %v304 = vadd.f32 %v301, %v303
    %v305 = vrot.slane %v304, 2
    %v306 = vadd.f32 %v304, %v305
    %v307 = vrot.slane %v306, 1
    %v308 = vadd.f32 %v306, %v307
    %v309 = vmul.f32 %v308, 0.125
    %v310 = vmul.f32 %v301, %v301
    %v311 = vrot.slane %v310, 4
    %v312 = vadd.f32 %v310, %v311
    %v313 = vrot.slane %v312, 2
    %v314 = vadd.f32 %v312, %v313
    %v315 = vrot.slane %v314, 1
    %v316 = vadd.f32 %v314, %v315
    %v317 = vmul.f32 %v316, 0.125
    %v318 = vmul.f32 %v309, %v309
    %v319 = vsub.f32 %v317, %v318
    %v320 = vsub.f32 %v301, %v309
    %v321 = vadd.f32 %v319, 1e-05
    %v322 = vrsqrt.pop %v321
    %v323 = vmul.f32 %v322, %v321
    %v324 = vmul.f32 %v323, %v322
    %v325 = vmul.f32 0.5, %v324
    %v326 = vsub.f32 1.5, %v325
    %v327 = vmul.f32 %v322, %v326
    %vm328 = vweird.f32 %v321
    %vm329 = vweird.f32 %v322
    %vm330 = vmor %vm328, %vm329
    %v331 = vsel %vm330, %v322, %v327
    %v332 = vmul.f32 %v320, %v331
    %v333 = vmul.f32 %v332, 0.2
    %v334 = vmax.f32 %v332, %v333
    %v335 = vld [vmem:[#allocation2 + $0x200] sm:$0xff]
    %v336 = vld [vmem:[#allocation2 + $0x208] sm:$0xff]
    %v337 = vld [vmem:[#allocation2 + $0x210] sm:$0xff]
    %v338 = vld [vmem:[#allocation2 + $0x218] sm:$0xff]
    %v339 = vld [vmem:[#allocation2 + $0x220] sm:$0xff]
    %v340 = vld [vmem:[#allocation2 + $0x228] sm:$0xff]
    %v341 = vld [vmem:[#allocation2 + $0x230] sm:$0xff]
    %v342 = vld [vmem:[#allocation2 + $0x238] sm:$0xff]
    %v343 = vld [vmem:[#allocation2 + $0x240] sm:$0xff]
    %v344 = vld [vmem:[#allocation2 + $0x248] sm:$0xff]
    %v345 = vld [vmem:[#allocation2 + $0x250] sm:$0xff]
    %v346 = vld [vmem:[#allocation2 + $0x258] sm:$0xff]
    %v347 = vld [vmem:[#allocation2 + $0x260] sm:$0xff]
    %v348 = vld [vmem:[#allocation2 + $0x268] sm:$0xff]
    %v349 = vld [vmem:[#allocation2 + $0x270] sm:$0xff]
    %v350 = vld [vmem:[#allocation2 + $0x278] sm:$0xff]
    %351 = vmatpush.msra.mxu0 %v350
    %352 = vmatpush.msra.mxu0 %v349
    %353 = vmatpush.msra.mxu0 %v348
    %354 = vmatpush.msra.mxu0 %v347
    %355 = vmatpush.msra.mxu0 %v346
    %356 = vmatpush.msra.mxu0 %v345
    %357 = vmatpush.msra.mxu0 %v344
    %358 = vmatpush.msra.mxu0 %v343
    %359 = vmatpush.msra.mxu0 %v342
    %360 = vmatpush.msra.mxu0 %v341
    %361 = vmatpush.msra.mxu0 %v340
    %362 = vmatpush.msra.mxu0 %v339
    %363 = vmatpush.msra.mxu0 %v338
    %364 = vmatpush.msra.mxu0 %v337
    %365 = vmatpush.msra.mxu0 %v336
    %366 = vmatpush.msra.mxu0 %v335
    %367 = vmatmul.f32.gmra.mxu0 %v334
    %v368 = vpop.f32.mrf.mxu0
    %v369 = vadd.f32 0.0, %v368
    %370 = vdwg.mxu0
    %v371 = vrot.slane %v369, 4
    %v372 = vadd.f32 %v369, %v371
    %v373 = vrot.slane %v372, 2
    %v374 = vadd.f32 %v372, %v373
    %v375 = vrot.slane %v374, 1
    %v376 = vadd.f32 %v374, %v375
    %v377 = vmul.f32 %v376, 0.125
    %v378 = vmul.f32 %v369, %v369
    %v379 = vrot.slane %v378, 4
    %v380 = vadd.f32 %v378, %v379
    %v381 = vrot.slane %v380, 2
    %v382 = vadd.f32 %v380, %v381
    %v383 = vrot.slane %v382, 1
    %v384 = vadd.f32 %v382, %v383
    %v385 = vmul.f32 %v384, 0.125
    %v386 = vmul.f32 %v377, %v377
    %v387 = vsub.f32 %v385, %v386
    %v388 = vsub.f32 %v369, %v377
    %v389 = vadd.f32 %v387, 1e-05
    %v390 = vrsqrt.pop %v389
    %v391 = vmul.f32 %v390, %v389
    %v392 = vmul.f32 %v391, %v390
    %v393 = vmul.f32 0.5, %v392
    %v394 = vsub.f32 1.5, %v393
    %v395 = vmul.f32 %v390, %v394
    %vm396 = vweird.f32 %v389
    %vm397 = vweird.f32 %v390
    %vm398 = vmor %vm396, %vm397
    %v399 = vsel %vm398, %v390, %v395
    %v400 = vmul.f32 %v388, %v399
    %v401 = vmul.f32 %v400, 0.2
    %v402 = vmax.f32 %v400, %v401
    %v403 = vld [vmem:[#allocation2 + $0x280] sm:$0xff]
    %v404 = vld [vmem:[#allocation2 + $0x288] sm:$0xff]
    %v405 = vld [vmem:[#allocation2 + $0x290] sm:$0xff]
    %v406 = vld [vmem:[#allocation2 + $0x298] sm:$0xff]
    %v407 = vld [vmem:[#allocation2 + $0x2a0] sm:$0xff]
    %v408 = vld [vmem:[#allocation2 + $0x2a8] sm:$0xff]
    %v409 = vld [vmem:[#allocation2 + $0x2b0] sm:$0xff]
    %v410 = vld [vmem:[#allocation2 + $0x2b8] sm:$0xff]
    %v411 = vld [vmem:[#allocation2 + $0x2c0] sm:$0xff]
    %v412 = vld [vmem:[#allocation2 + $0x2c8] sm:$0xff]
    %v413 = vld [vmem:[#allocation2 + $0x2d0] sm:$0xff]
    %v414 = vld [vmem:[#allocation2 + $0x2d8] sm:$0xff]
    %v415 = vld [vmem:[#allocation2 + $0x2e0] sm:$0xff]
    %v416 = vld [vmem:[#allocation2 + $0x2e8] sm:$0xff]
    %v417 = vld [vmem:[#allocation2 + $0x2f0] sm:$0xff]
    %v418 = vld [vmem:[#allocation2 + $0x2f8] sm:$0xff]
    %v419 = vld [vmem:[#allocation6] ss:$0 sm:$0xff]
    %420 = vmatpush.msra.mxu0 %v418
    %421 = vmatpush.msra.mxu0 %v417
    %422 = vmatpush.msra.mxu0 %v416
    %423 = vmatpush.msra.mxu0 %v415
    %424 = vmatpush.msra.mxu0 %v414
    %425 = vmatpush.msra.mxu0 %v413
    %426 = vmatpush.msra.mxu0 %v412
    %427 = vmatpush.msra.mxu0 %v411
    %428 = vmatpush.msra.mxu0 %v410
    %429 = vmatpush.msra.mxu0 %v409
    %430 = vmatpush.msra.mxu0 %v408
    %431 = vmatpush.msra.mxu0 %v407
    %432 = vmatpush.msra.mxu0 %v406
    %433 = vmatpush.msra.mxu0 %v405
    %434 = vmatpush.msra.mxu0 %v404
    %435 = vmatpush.msra.mxu0 %v403
    %436 = vmatmul.f32.gmra.mxu0 %v402
    %v437 = vpop.f32.mrf.mxu0
    %v438 = vadd.f32 %v419, %v437
    %439 = vdwg.mxu0
    %v440 = vadd.f32 %v438, %v62
    %v441 = vld [vmem:[#allocation4] sm:$0xff]
    %v442 = vld [vmem:[#allocation4 + $0x8] sm:$0xff]
    %v443 = vld [vmem:[#allocation4 + $0x10] sm:$0xff]
    %v444 = vld [vmem:[#allocation4 + $0x18] sm:$0xff]
    %v445 = vld [vmem:[#allocation4 + $0x20] sm:$0xff]
    %v446 = vld [vmem:[#allocation4 + $0x28] sm:$0xff]
    %v447 = vld [vmem:[#allocation4 + $0x30] sm:$0xff]
    %v448 = vld [vmem:[#allocation4 + $0x38] sm:$0xff]
    %v449 = vld [vmem:[#allocation4 + $0x40] sm:$0xff]
    %v450 = vld [vmem:[#allocation4 + $0x48] sm:$0xff]
    %v451 = vld [vmem:[#allocation4 + $0x50] sm:$0xff]
    %v452 = vld [vmem:[#allocation4 + $0x58] sm:$0xff]
    %v453 = vld [vmem:[#allocation4 + $0x60] sm:$0xff]
    %v454 = vld [vmem:[#allocation4 + $0x68] sm:$0xff]
    %v455 = vld [vmem:[#allocation4 + $0x70] sm:$0xff]
    %v456 = vld [vmem:[#allocation4 + $0x78] sm:$0xff]
    %v457 = vld [vmem:[#allocation4 + $0x80] sm:$0xff]
    %v458 = vld [vmem:[#allocation4 + $0x88] sm:$0xff]
    %v459 = vld [vmem:[#allocation4 + $0x90] sm:$0xff]
    %v460 = vld [vmem:[#allocation4 + $0x98] sm:$0xff]
    %v461 = vld [vmem:[#allocation4 + $0xa0] sm:$0xff]
    %v462 = vld [vmem:[#allocation4 + $0xa8] sm:$0xff]
    %v463 = vld [vmem:[#allocation4 + $0xb0] sm:$0xff]
    %v464 = vld [vmem:[#allocation4 + $0xb8] sm:$0xff]
    %v465 = vld [vmem:[#allocation4 + $0xc0] sm:$0xff]
    %v466 = vld [vmem:[#allocation4 + $0xc8] sm:$0xff]
    %v467 = vld [vmem:[#allocation4 + $0xd0] sm:$0xff]
    %v468 = vld [vmem:[#allocation4 + $0xd8] sm:$0xff]
    %v469 = vld [vmem:[#allocation4 + $0xe0] sm:$0xff]
    %v470 = vld [vmem:[#allocation4 + $0xe8] sm:$0xff]
    %v471 = vld [vmem:[#allocation4 + $0xf0] sm:$0xff]
    %v472 = vld [vmem:[#allocation4 + $0xf8] sm:$0xff]
    %v473 = vld [vmem:[#allocation4 + $0x100] sm:$0xff]
    %v474 = vld [vmem:[#allocation4 + $0x108] sm:$0xff]
    %v475 = vld [vmem:[#allocation4 + $0x110] sm:$0xff]
    %v476 = vld [vmem:[#allocation4 + $0x118] sm:$0xff]
    %v477 = vld [vmem:[#allocation4 + $0x120] sm:$0xff]
    %v478 = vld [vmem:[#allocation4 + $0x128] sm:$0xff]
    %v479 = vld [vmem:[#allocation4 + $0x130] sm:$0xff]
    %v480 = vld [vmem:[#allocation4 + $0x138] sm:$0xff]
    %v481 = vld [vmem:[#allocation4 + $0x140] sm:$0xff]
    %v482 = vld [vmem:[#allocation4 + $0x148] sm:$0xff]
    %v483 = vld [vmem:[#allocation4 + $0x150] sm:$0xff]
    %v484 = vld [vmem:[#allocation4 + $0x158] sm:$0xff]
    %v485 = vld [vmem:[#allocation4 + $0x160] sm:$0xff]
    %v486 = vld [vmem:[#allocation4 + $0x168] sm:$0xff]
    %v487 = vld [vmem:[#allocation4 + $0x170] sm:$0xff]
    %v488 = vld [vmem:[#allocation4 + $0x178] sm:$0xff]
    %v489 = vld [vmem:[#allocation4 + $0x180] sm:$0xff]
    %v490 = vld [vmem:[#allocation4 + $0x188] sm:$0xff]
    %v491 = vld [vmem:[#allocation4 + $0x190] sm:$0xff]
    %v492 = vld [vmem:[#allocation4 + $0x198] sm:$0xff]
    %v493 = vld [vmem:[#allocation4 + $0x1a0] sm:$0xff]
    %v494 = vld [vmem:[#allocation4 + $0x1a8] sm:$0xff]
    %v495 = vld [vmem:[#allocation4 + $0x1b0] sm:$0xff]
    %v496 = vld [vmem:[#allocation4 + $0x1b8] sm:$0xff]
    %v497 = vld [vmem:[#allocation4 + $0x1c0] sm:$0xff]
    %v498 = vld [vmem:[#allocation4 + $0x1c8] sm:$0xff]
    %v499 = vld [vmem:[#allocation4 + $0x1d0] sm:$0xff]
    %v500 = vld [vmem:[#allocation4 + $0x1d8] sm:$0xff]
    %v501 = vld [vmem:[#allocation4 + $0x1e0] sm:$0xff]
    %v502 = vld [vmem:[#allocation4 + $0x1e8] sm:$0xff]
    %v503 = vld [vmem:[#allocation4 + $0x1f0] sm:$0xff]
    %v504 = vld [vmem:[#allocation4 + $0x1f8] sm:$0xff]
    %505 = vmatpush.msra.mxu0 %v471
    %506 = vmatpush.msra.mxu0 %v469
    %507 = vmatpush.msra.mxu0 %v467
    %508 = vmatpush.msra.mxu0 %v465
    %509 = vmatpush.msra.mxu0 %v463
    %510 = vmatpush.msra.mxu0 %v461
    %511 = vmatpush.msra.mxu0 %v459
    %512 = vmatpush.msra.mxu0 %v457
    %513 = vmatpush.msra.mxu0 %v455
    %514 = vmatpush.msra.mxu0 %v453
    %515 = vmatpush.msra.mxu0 %v451
    %516 = vmatpush.msra.mxu0 %v449
    %517 = vmatpush.msra.mxu0 %v447
    %518 = vmatpush.msra.mxu0 %v445
    %519 = vmatpush.msra.mxu0 %v443
    %520 = vmatpush.msra.mxu0 %v441
    %521 = vmatmul.f32.gmra.mxu0 %v440
    %v522 = vpop.f32.mrf.mxu0
    %v523 = vadd.f32 0.0, %v522
    %524 = vdwg.mxu0
    %525 = vmatpush.msra.mxu0 %v503
    %526 = vmatpush.msra.mxu0 %v501
    %527 = vmatpush.msra.mxu0 %v499
    %528 = vmatpush.msra.mxu0 %v497
    %529 = vmatpush.msra.mxu0 %v495
    %530 = vmatpush.msra.mxu0 %v493
    %531 = vmatpush.msra.mxu0 %v491
    %532 = vmatpush.msra.mxu0 %v489
    %533 = vmatpush.msra.mxu0 %v487
    %534 = vmatpush.msra.mxu0 %v485
    %535 = vmatpush.msra.mxu0 %v483
    %536 = vmatpush.msra.mxu0 %v481
    %537 = vmatpush.msra.mxu0 %v479
    %538 = vmatpush.msra.mxu0 %v477
    %539 = vmatpush.msra.mxu0 %v475
    %540 = vmatpush.msra.mxu0 %v473
    %541 = vmatmul.f32.gmra.mxu0 %v438
    %v542 = vpop.f32.mrf.mxu0
    %v543 = vadd.f32 %v523, %v542
    %544 = vdwg.mxu0
    %545 = vmatpush.msra.mxu0 %v472
    %546 = vmatpush.msra.mxu0 %v470
    %547 = vmatpush.msra.mxu0 %v468
    %548 = vmatpush.msra.mxu0 %v466
    %549 = vmatpush.msra.mxu0 %v464
    %550 = vmatpush.msra.mxu0 %v462
    %551 = vmatpush.msra.mxu0 %v460
    %552 = vmatpush.msra.mxu0 %v458
    %553 = vmatpush.msra.mxu0 %v456
    %554 = vmatpush.msra.mxu0 %v454
    %555 = vmatpush.msra.mxu0 %v452
    %556 = vmatpush.msra.mxu0 %v450
    %557 = vmatpush.msra.mxu0 %v448
    %558 = vmatpush.msra.mxu0 %v446
    %559 = vmatpush.msra.mxu0 %v444
    %560 = vmatpush.msra.mxu0 %v442
    %561 = vmatmul.f32.gmra.mxu0 %v440
    %v562 = vpop.f32.mrf.mxu0
    %v563 = vadd.f32 0.0, %v562
    %564 = vdwg.mxu0
    %565 = vmatpush.msra.mxu0 %v504
    %566 = vmatpush.msra.mxu0 %v502
    %567 = vmatpush.msra.mxu0 %v500
    %568 = vmatpush.msra.mxu0 %v498
    %569 = vmatpush.msra.mxu0 %v496
    %570 = vmatpush.msra.mxu0 %v494
    %571 = vmatpush.msra.mxu0 %v492
    %572 = vmatpush.msra.mxu0 %v490
    %573 = vmatpush.msra.mxu0 %v488
    %574 = vmatpush.msra.mxu0 %v486
    %575 = vmatpush.msra.mxu0 %v484
    %576 = vmatpush.msra.mxu0 %v482
    %577 = vmatpush.msra.mxu0 %v480
    %578 = vmatpush.msra.mxu0 %v478
    %579 = vmatpush.msra.mxu0 %v476
    %580 = vmatpush.msra.mxu0 %v474
    %581 = vmatmul.f32.gmra.mxu0 %v438
    %v582 = vpop.f32.mrf.mxu0
    %v583 = vadd.f32 %v563, %v582
    %584 = vdwg.mxu0
    %v585 = vrot.slane %v543, 4
    %v586 = vadd.f32 %v543, %v585
    %v587 = vrot.slane %v586, 2
    %v588 = vadd.f32 %v586, %v587
    %v589 = vrot.slane %v588, 1
    %v590 = vadd.f32 %v588, %v589
    %v591 = vrot.slane %v583, 4
    %v592 = vadd.f32 %v583, %v591
    %v593 = vrot.slane %v592, 2
    %v594 = vadd.f32 %v592, %v593
    %v595 = vrot.slane %v594, 1
    %v596 = vadd.f32 %v594, %v595
    %v597 = vmul.f32 %v590, 0.125
    %v598 = vmul.f32 %v596, 0.125
    %v599 = vmul.f32 %v543, %v543
    %v600 = vmul.f32 %v583, %v583
    %v601 = vrot.slane %v599, 4
    %v602 = vadd.f32 %v599, %v601
    %v603 = vrot.slane %v602, 2
    %v604 = vadd.f32 %v602, %v603
    %v605 = vrot.slane %v604, 1
    %v606 = vadd.f32 %v604, %v605
    %v607 = vrot.slane %v600, 4
    %v608 = vadd.f32 %v600, %v607
    %v609 = vrot.slane %v608, 2
    %v610 = vadd.f32 %v608, %v609
    %v611 = vrot.slane %v610, 1
    %v612 = vadd.f32 %v610, %v611
    %v613 = vmul.f32 %v606, 0.125
    %v614 = vmul.f32 %v612, 0.125
    %v615 = vmul.f32 %v597, %v597
    %v616 = vmul.f32 %v598, %v598
    %v617 = vsub.f32 %v613, %v615
    %v618 = vsub.f32 %v614, %v616
    %v619 = vsub.f32 %v543, %v597
    %v620 = vsub.f32 %v583, %v598
    %v621 = vadd.f32 %v617, 1e-05
    %v622 = vadd.f32 %v618, 1e-05
    %v623 = vrsqrt.pop %v621
    %v624 = vmul.f32 %v623, %v621
    %v625 = vmul.f32 %v624, %v623
    %v626 = vmul.f32 0.5, %v625
    %v627 = vsub.f32 1.5, %v626
    %v628 = vmul.f32 %v623, %v627
    %vm629 = vweird.f32 %v621
    %vm630 = vweird.f32 %v623
    %vm631 = vmor %vm629, %vm630
    %v632 = vsel %vm631, %v623, %v628
    %v633 = vrsqrt.pop %v622
    %v634 = vmul.f32 %v633, %v622
    %v635 = vmul.f32 %v634, %v633
    %v636 = vmul.f32 0.5, %v635
    %v637 = vsub.f32 1.5, %v636
    %v638 = vmul.f32 %v633, %v637
    %vm639 = vweird.f32 %v622
    %vm640 = vweird.f32 %v633
    %vm641 = vmor %vm639, %vm640
    %v642 = vsel %vm641, %v633, %v638
    %v643 = vmul.f32 %v619, %v632
    %v644 = vmul.f32 %v620, %v642
    %v645 = vmul.f32 %v643, 0.2
    %v646 = vmul.f32 %v644, 0.2
    %v647 = vmax.f32 %v643, %v645
    %v648 = vmax.f32 %v644, %v646
    %v649 = vld [vmem:[#allocation4 + $0x200] sm:$0xff]
    %v650 = vld [vmem:[#allocation4 + $0x208] sm:$0xff]
    %v651 = vld [vmem:[#allocation4 + $0x210] sm:$0xff]
    %v652 = vld [vmem:[#allocation4 + $0x218] sm:$0xff]
    %v653 = vld [vmem:[#allocation4 + $0x220] sm:$0xff]
    %v654 = vld [vmem:[#allocation4 + $0x228] sm:$0xff]
    %v655 = vld [vmem:[#allocation4 + $0x230] sm:$0xff]
    %v656 = vld [vmem:[#allocation4 + $0x238] sm:$0xff]
    %v657 = vld [vmem:[#allocation4 + $0x240] sm:$0xff]
    %v658 = vld [vmem:[#allocation4 + $0x248] sm:$0xff]
    %v659 = vld [vmem:[#allocation4 + $0x250] sm:$0xff]
    %v660 = vld [vmem:[#allocation4 + $0x258] sm:$0xff]
    %v661 = vld [vmem:[#allocation4 + $0x260] sm:$0xff]
    %v662 = vld [vmem:[#allocation4 + $0x268] sm:$0xff]
    %v663 = vld [vmem:[#allocation4 + $0x270] sm:$0xff]
    %v664 = vld [vmem:[#allocation4 + $0x278] sm:$0xff]
    %v665 = vld [vmem:[#allocation4 + $0x280] sm:$0xff]
    %v666 = vld [vmem:[#allocation4 + $0x288] sm:$0xff]
    %v667 = vld [vmem:[#allocation4 + $0x290] sm:$0xff]
    %v668 = vld [vmem:[#allocation4 + $0x298] sm:$0xff]
    %v669 = vld [vmem:[#allocation4 + $0x2a0] sm:$0xff]
    %v670 = vld [vmem:[#allocation4 + $0x2a8] sm:$0xff]
    %v671 = vld [vmem:[#allocation4 + $0x2b0] sm:$0xff]
    %v672 = vld [vmem:[#allocation4 + $0x2b8] sm:$0xff]
    %v673 = vld [vmem:[#allocation4 + $0x2c0] sm:$0xff]
    %v674 = vld [vmem:[#allocation4 + $0x2c8] sm:$0xff]
    %v675 = vld [vmem:[#allocation4 + $0x2d0] sm:$0xff]
    %v676 = vld [vmem:[#allocation4 + $0x2d8] sm:$0xff]
    %v677 = vld [vmem:[#allocation4 + $0x2e0] sm:$0xff]
    %v678 = vld [vmem:[#allocation4 + $0x2e8] sm:$0xff]
    %v679 = vld [vmem:[#allocation4 + $0x2f0] sm:$0xff]
    %v680 = vld [vmem:[#allocation4 + $0x2f8] sm:$0xff]
    %v681 = vld [vmem:[#allocation4 + $0x300] sm:$0xff]
    %v682 = vld [vmem:[#allocation4 + $0x308] sm:$0xff]
    %v683 = vld [vmem:[#allocation4 + $0x310] sm:$0xff]
    %v684 = vld [vmem:[#allocation4 + $0x318] sm:$0xff]
    %v685 = vld [vmem:[#allocation4 + $0x320] sm:$0xff]
    %v686 = vld [vmem:[#allocation4 + $0x328] sm:$0xff]
    %v687 = vld [vmem:[#allocation4 + $0x330] sm:$0xff]
    %v688 = vld [vmem:[#allocation4 + $0x338] sm:$0xff]
    %v689 = vld [vmem:[#allocation4 + $0x340] sm:$0xff]
    %v690 = vld [vmem:[#allocation4 + $0x348] sm:$0xff]
    %v691 = vld [vmem:[#allocation4 + $0x350] sm:$0xff]
    %v692 = vld [vmem:[#allocation4 + $0x358] sm:$0xff]
    %v693 = vld [vmem:[#allocation4 + $0x360] sm:$0xff]
    %v694 = vld [vmem:[#allocation4 + $0x368] sm:$0xff]
    %v695 = vld [vmem:[#allocation4 + $0x370] sm:$0xff]
    %v696 = vld [vmem:[#allocation4 + $0x378] sm:$0xff]
    %v697 = vld [vmem:[#allocation4 + $0x380] sm:$0xff]
    %v698 = vld [vmem:[#allocation4 + $0x388] sm:$0xff]
    %v699 = vld [vmem:[#allocation4 + $0x390] sm:$0xff]
    %v700 = vld [vmem:[#allocation4 + $0x398] sm:$0xff]
    %v701 = vld [vmem:[#allocation4 + $0x3a0] sm:$0xff]
    %v702 = vld [vmem:[#allocation4 + $0x3a8] sm:$0xff]
    %v703 = vld [vmem:[#allocation4 + $0x3b0] sm:$0xff]
    %v704 = vld [vmem:[#allocation4 + $0x3b8] sm:$0xff]
    %v705 = vld [vmem:[#allocation4 + $0x3c0] sm:$0xff]
    %v706 = vld [vmem:[#allocation4 + $0x3c8] sm:$0xff]
    %v707 = vld [vmem:[#allocation4 + $0x3d0] sm:$0xff]
    %v708 = vld [vmem:[#allocation4 + $0x3d8] sm:$0xff]
    %v709 = vld [vmem:[#allocation4 + $0x3e0] sm:$0xff]
    %v710 = vld [vmem:[#allocation4 + $0x3e8] sm:$0xff]
    %v711 = vld [vmem:[#allocation4 + $0x3f0] sm:$0xff]
    %v712 = vld [vmem:[#allocation4 + $0x3f8] sm:$0xff]
    %713 = vmatpush.msra.mxu0 %v679
    %714 = vmatpush.msra.mxu0 %v677
    %715 = vmatpush.msra.mxu0 %v675
    %716 = vmatpush.msra.mxu0 %v673
    %717 = vmatpush.msra.mxu0 %v671
    %718 = vmatpush.msra.mxu0 %v669
    %719 = vmatpush.msra.mxu0 %v667
    %720 = vmatpush.msra.mxu0 %v665
    %721 = vmatpush.msra.mxu0 %v663
    %722 = vmatpush.msra.mxu0 %v661
    %723 = vmatpush.msra.mxu0 %v659
    %724 = vmatpush.msra.mxu0 %v657
    %725 = vmatpush.msra.mxu0 %v655
    %726 = vmatpush.msra.mxu0 %v653
    %727 = vmatpush.msra.mxu0 %v651
    %728 = vmatpush.msra.mxu0 %v649
    %729 = vmatmul.f32.gmra.mxu0 %v647
    %v730 = vpop.f32.mrf.mxu0
    %v731 = vadd.f32 0.0, %v730
    %732 = vdwg.mxu0
    %733 = vmatpush.msra.mxu0 %v711
    %734 = vmatpush.msra.mxu0 %v709
    %735 = vmatpush.msra.mxu0 %v707
    %736 = vmatpush.msra.mxu0 %v705
    %737 = vmatpush.msra.mxu0 %v703
    %738 = vmatpush.msra.mxu0 %v701
    %739 = vmatpush.msra.mxu0 %v699
    %740 = vmatpush.msra.mxu0 %v697
    %741 = vmatpush.msra.mxu0 %v695
    %742 = vmatpush.msra.mxu0 %v693
    %743 = vmatpush.msra.mxu0 %v691
    %744 = vmatpush.msra.mxu0 %v689
    %745 = vmatpush.msra.mxu0 %v687
    %746 = vmatpush.msra.mxu0 %v685
    %747 = vmatpush.msra.mxu0 %v683
    %748 = vmatpush.msra.mxu0 %v681
    %749 = vmatmul.f32.gmra.mxu0 %v648
    %v750 = vpop.f32.mrf.mxu0
    %v751 = vadd.f32 %v731, %v750
    %752 = vdwg.mxu0
    %753 = vmatpush.msra.mxu0 %v680
    %754 = vmatpush.msra.mxu0 %v678
    %755 = vmatpush.msra.mxu0 %v676
    %756 = vmatpush.msra.mxu0 %v674
    %757 = vmatpush.msra.mxu0 %v672
    %758 = vmatpush.msra.mxu0 %v670
    %759 = vmatpush.msra.mxu0 %v668
    %760 = vmatpush.msra.mxu0 %v666
    %761 = vmatpush.msra.mxu0 %v664
    %762 = vmatpush.msra.mxu0 %v662
    %763 = vmatpush.msra.mxu0 %v660
    %764 = vmatpush.msra.mxu0 %v658
    %765 = vmatpush.msra.mxu0 %v656
    %766 = vmatpush.msra.mxu0 %v654
    %767 = vmatpush.msra.mxu0 %v652
    %768 = vmatpush.msra.mxu0 %v650
    %769 = vmatmul.f32.gmra.mxu0 %v647
    %v770 = vpop.f32.mrf.mxu0
    %v771 = vadd.f32 0.0, %v770
    %772 = vdwg.mxu0
    %773 = vmatpush.msra.mxu0 %v712
    %774 = vmatpush.msra.mxu0 %v710
    %775 = vmatpush.msra.mxu0 %v708
    %776 = vmatpush.msra.mxu0 %v706
    %777 = vmatpush.msra.mxu0 %v704
    %778 = vmatpush.msra.mxu0 %v702
    %779 = vmatpush.msra.mxu0 %v700
    %780 = vmatpush.msra.mxu0 %v698
    %781 = vmatpush.msra.mxu0 %v696
    %782 = vmatpush.msra.mxu0 %v694
    %783 = vmatpush.msra.mxu0 %v692
    %784 = vmatpush.msra.mxu0 %v690
    %785 = vmatpush.msra.mxu0 %v688
    %786 = vmatpush.msra.mxu0 %v686
    %787 = vmatpush.msra.mxu0 %v684
    %788 = vmatpush.msra.mxu0 %v682
    %789 = vmatmul.f32.gmra.mxu0 %v648
    %v790 = vpop.f32.mrf.mxu0
    %v791 = vadd.f32 %v771, %v790
    %792 = vdwg.mxu0
    %v793 = vrot.slane %v751, 4
    %v794 = vadd.f32 %v751, %v793
    %v795 = vrot.slane %v794, 2
    %v796 = vadd.f32 %v794, %v795
    %v797 = vrot.slane %v796, 1
    %v798 = vadd.f32 %v796, %v797
    %v799 = vrot.slane %v791, 4
    %v800 = vadd.f32 %v791, %v799
    %v801 = vrot.slane %v800, 2
    %v802 = vadd.f32 %v800, %v801
    %v803 = vrot.slane %v802, 1
    %v804 = vadd.f32 %v802, %v803
    %v805 = vmul.f32 %v798, 0.125
    %v806 = vmul.f32 %v804, 0.125
    %v807 = vmul.f32 %v751, %v751
    %v808 = vmul.f32 %v791, %v791
    %v809 = vrot.slane %v807, 4
    %v810 = vadd.f32 %v807, %v809
    %v811 = vrot.slane %v810, 2
    %v812 = vadd.f32 %v810, %v811
    %v813 = vrot.slane %v812, 1
    %v814 = vadd.f32 %v812, %v813
    %v815 = vrot.slane %v808, 4
    %v816 = vadd.f32 %v808, %v815
    %v817 = vrot.slane %v816, 2
    %v818 = vadd.f32 %v816, %v817
    %v819 = vrot.slane %v818, 1
    %v820 = vadd.f32 %v818, %v819
    %v821 = vmul.f32 %v814, 0.125
    %v822 = vmul.f32 %v820, 0.125
    %v823 = vmul.f32 %v805, %v805
    %v824 = vmul.f32 %v806, %v806
    %v825 = vsub.f32 %v821, %v823
    %v826 = vsub.f32 %v822, %v824
    %v827 = vsub.f32 %v751, %v805
    %v828 = vsub.f32 %v791, %v806
    %v829 = vadd.f32 %v825, 1e-05
    %v830 = vadd.f32 %v826, 1e-05
    %v831 = vrsqrt.pop %v829
    %v832 = vmul.f32 %v831, %v829
    %v833 = vmul.f32 %v832, %v831
    %v834 = vmul.f32 0.5, %v833
    %v835 = vsub.f32 1.5, %v834
    %v836 = vmul.f32 %v831, %v835
    %vm837 = vweird.f32 %v829
    %vm838 = vweird.f32 %v831
    %vm839 = vmor %vm837, %vm838
    %v840 = vsel %vm839, %v831, %v836
    %v841 = vrsqrt.pop %v830
    %v842 = vmul.f32 %v841, %v830
    %v843 = vmul.f32 %v842, %v841
    %v844 = vmul.f32 0.5, %v843
    %v845 = vsub.f32 1.5, %v844
    %v846 = vmul.f32 %v841, %v845
    %vm847 = vweird.f32 %v830
    %vm848 = vweird.f32 %v841
    %vm849 = vmor %vm847, %vm848
    %v850 = vsel %vm849, %v841, %v846
    %v851 = vmul.f32 %v827, %v840
    %v852 = vmul.f32 %v828, %v850
    %v853 = vmul.f32 %v851, 0.2
    %v854 = vmul.f32 %v852, 0.2
    %v855 = vmax.f32 %v851, %v853
    %v856 = vmax.f32 %v852, %v854
    %v857 = vld [vmem:[#allocation4 + $0x400] sm:$0xff]
    %v858 = vld [vmem:[#allocation4 + $0x408] sm:$0xff]
    %v859 = vld [vmem:[#allocation4 + $0x410] sm:$0xff]
    %v860 = vld [vmem:[#allocation4 + $0x418] sm:$0xff]
    %v861 = vld [vmem:[#allocation4 + $0x420] sm:$0xff]
    %v862 = vld [vmem:[#allocation4 + $0x428] sm:$0xff]
    %v863 = vld [vmem:[#allocation4 + $0x430] sm:$0xff]
    %v864 = vld [vmem:[#allocation4 + $0x438] sm:$0xff]
    %v865 = vld [vmem:[#allocation4 + $0x440] sm:$0xff]
    %v866 = vld [vmem:[#allocation4 + $0x448] sm:$0xff]
    %v867 = vld [vmem:[#allocation4 + $0x450] sm:$0xff]
    %v868 = vld [vmem:[#allocation4 + $0x458] sm:$0xff]
    %v869 = vld [vmem:[#allocation4 + $0x460] sm:$0xff]
    %v870 = vld [vmem:[#allocation4 + $0x468] sm:$0xff]
    %v871 = vld [vmem:[#allocation4 + $0x470] sm:$0xff]
    %v872 = vld [vmem:[#allocation4 + $0x478] sm:$0xff]
    %v873 = vld [vmem:[#allocation4 + $0x480] sm:$0xff]
    %v874 = vld [vmem:[#allocation4 + $0x488] sm:$0xff]
    %v875 = vld [vmem:[#allocation4 + $0x490] sm:$0xff]
    %v876 = vld [vmem:[#allocation4 + $0x498] sm:$0xff]
    %v877 = vld [vmem:[#allocation4 + $0x4a0] sm:$0xff]
    %v878 = vld [vmem:[#allocation4 + $0x4a8] sm:$0xff]
    %v879 = vld [vmem:[#allocation4 + $0x4b0] sm:$0xff]
    %v880 = vld [vmem:[#allocation4 + $0x4b8] sm:$0xff]
    %v881 = vld [vmem:[#allocation4 + $0x4c0] sm:$0xff]
    %v882 = vld [vmem:[#allocation4 + $0x4c8] sm:$0xff]
    %v883 = vld [vmem:[#allocation4 + $0x4d0] sm:$0xff]
    %v884 = vld [vmem:[#allocation4 + $0x4d8] sm:$0xff]
    %v885 = vld [vmem:[#allocation4 + $0x4e0] sm:$0xff]
    %v886 = vld [vmem:[#allocation4 + $0x4e8] sm:$0xff]
    %v887 = vld [vmem:[#allocation4 + $0x4f0] sm:$0xff]
    %v888 = vld [vmem:[#allocation4 + $0x4f8] sm:$0xff]
    %v889 = vld [vmem:[#allocation4 + $0x500] sm:$0xff]
    %v890 = vld [vmem:[#allocation4 + $0x508] sm:$0xff]
    %v891 = vld [vmem:[#allocation4 + $0x510] sm:$0xff]
    %v892 = vld [vmem:[#allocation4 + $0x518] sm:$0xff]
    %v893 = vld [vmem:[#allocation4 + $0x520] sm:$0xff]
    %v894 = vld [vmem:[#allocation4 + $0x528] sm:$0xff]
    %v895 = vld [vmem:[#allocation4 + $0x530] sm:$0xff]
    %v896 = vld [vmem:[#allocation4 + $0x538] sm:$0xff]
    %v897 = vld [vmem:[#allocation4 + $0x540] sm:$0xff]
    %v898 = vld [vmem:[#allocation4 + $0x548] sm:$0xff]
    %v899 = vld [vmem:[#allocation4 + $0x550] sm:$0xff]
    %v900 = vld [vmem:[#allocation4 + $0x558] sm:$0xff]
    %v901 = vld [vmem:[#allocation4 + $0x560] sm:$0xff]
    %v902 = vld [vmem:[#allocation4 + $0x568] sm:$0xff]
    %v903 = vld [vmem:[#allocation4 + $0x570] sm:$0xff]
    %v904 = vld [vmem:[#allocation4 + $0x578] sm:$0xff]
    %v905 = vld [vmem:[#allocation4 + $0x580] sm:$0xff]
    %v906 = vld [vmem:[#allocation4 + $0x588] sm:$0xff]
    %v907 = vld [vmem:[#allocation4 + $0x590] sm:$0xff]
    %v908 = vld [vmem:[#allocation4 + $0x598] sm:$0xff]
    %v909 = vld [vmem:[#allocation4 + $0x5a0] sm:$0xff]
    %v910 = vld [vmem:[#allocation4 + $0x5a8] sm:$0xff]
    %v911 = vld [vmem:[#allocation4 + $0x5b0] sm:$0xff]
    %v912 = vld [vmem:[#allocation4 + $0x5b8] sm:$0xff]
    %v913 = vld [vmem:[#allocation4 + $0x5c0] sm:$0xff]
    %v914 = vld [vmem:[#allocation4 + $0x5c8] sm:$0xff]
    %v915 = vld [vmem:[#allocation4 + $0x5d0] sm:$0xff]
    %v916 = vld [vmem:[#allocation4 + $0x5d8] sm:$0xff]
    %v917 = vld [vmem:[#allocation4 + $0x5e0] sm:$0xff]
    %v918 = vld [vmem:[#allocation4 + $0x5e8] sm:$0xff]
    %v919 = vld [vmem:[#allocation4 + $0x5f0] sm:$0xff]
    %v920 = vld [vmem:[#allocation4 + $0x5f8] sm:$0xff]
    %921 = vmatpush.msra.mxu0 %v887
    %922 = vmatpush.msra.mxu0 %v885
    %923 = vmatpush.msra.mxu0 %v883
    %924 = vmatpush.msra.mxu0 %v881
    %925 = vmatpush.msra.mxu0 %v879
    %926 = vmatpush.msra.mxu0 %v877
    %927 = vmatpush.msra.mxu0 %v875
    %928 = vmatpush.msra.mxu0 %v873
    %929 = vmatpush.msra.mxu0 %v871
    %930 = vmatpush.msra.mxu0 %v869
    %931 = vmatpush.msra.mxu0 %v867
    %932 = vmatpush.msra.mxu0 %v865
    %933 = vmatpush.msra.mxu0 %v863
    %934 = vmatpush.msra.mxu0 %v861
    %935 = vmatpush.msra.mxu0 %v859
    %936 = vmatpush.msra.mxu0 %v857
    %937 = vmatmul.f32.gmra.mxu0 %v855
    %v938 = vpop.f32.mrf.mxu0
    %v939 = vadd.f32 0.0, %v938
    %940 = vdwg.mxu0
    %941 = vmatpush.msra.mxu0 %v919
    %942 = vmatpush.msra.mxu0 %v917
    %943 = vmatpush.msra.mxu0 %v915
    %944 = vmatpush.msra.mxu0 %v913
    %945 = vmatpush.msra.mxu0 %v911
    %946 = vmatpush.msra.mxu0 %v909
    %947 = vmatpush.msra.mxu0 %v907
    %948 = vmatpush.msra.mxu0 %v905
    %949 = vmatpush.msra.mxu0 %v903
    %950 = vmatpush.msra.mxu0 %v901
    %951 = vmatpush.msra.mxu0 %v899
    %952 = vmatpush.msra.mxu0 %v897
    %953 = vmatpush.msra.mxu0 %v895
    %954 = vmatpush.msra.mxu0 %v893
    %955 = vmatpush.msra.mxu0 %v891
    %956 = vmatpush.msra.mxu0 %v889
    %957 = vmatmul.f32.gmra.mxu0 %v856
    %v958 = vpop.f32.mrf.mxu0
    %v959 = vadd.f32 %v939, %v958
    %960 = vdwg.mxu0
    %961 = vmatpush.msra.mxu0 %v888
    %962 = vmatpush.msra.mxu0 %v886
    %963 = vmatpush.msra.mxu0 %v884
    %964 = vmatpush.msra.mxu0 %v882
    %965 = vmatpush.msra.mxu0 %v880
    %966 = vmatpush.msra.mxu0 %v878
    %967 = vmatpush.msra.mxu0 %v876
    %968 = vmatpush.msra.mxu0 %v874
    %969 = vmatpush.msra.mxu0 %v872
    %970 = vmatpush.msra.mxu0 %v870
    %971 = vmatpush.msra.mxu0 %v868
    %972 = vmatpush.msra.mxu0 %v866
    %973 = vmatpush.msra.mxu0 %v864
    %974 = vmatpush.msra.mxu0 %v862
    %975 = vmatpush.msra.mxu0 %v860
    %976 = vmatpush.msra.mxu0 %v858
    %977 = vmatmul.f32.gmra.mxu0 %v855
    %v978 = vpop.f32.mrf.mxu0
    %v979 = vadd.f32 0.0, %v978
    %980 = vdwg.mxu0
    %981 = vmatpush.msra.mxu0 %v920
    %982 = vmatpush.msra.mxu0 %v918
    %983 = vmatpush.msra.mxu0 %v916
    %984 = vmatpush.msra.mxu0 %v914
    %985 = vmatpush.msra.mxu0 %v912
    %986 = vmatpush.msra.mxu0 %v910
    %987 = vmatpush.msra.mxu0 %v908
    %988 = vmatpush.msra.mxu0 %v906
    %989 = vmatpush.msra.mxu0 %v904
    %990 = vmatpush.msra.mxu0 %v902
    %991 = vmatpush.msra.mxu0 %v900
    %992 = vmatpush.msra.mxu0 %v898
    %993 = vmatpush.msra.mxu0 %v896
    %994 = vmatpush.msra.mxu0 %v894
    %995 = vmatpush.msra.mxu0 %v892
    %996 = vmatpush.msra.mxu0 %v890
    %997 = vmatmul.f32.gmra.mxu0 %v856
    %v998 = vpop.f32.mrf.mxu0
    %v999 = vadd.f32 %v979, %v998
    %1000 = vdwg.mxu0
    %v1001 = vrot.slane %v959, 4
    %v1002 = vadd.f32 %v959, %v1001
    %v1003 = vrot.slane %v1002, 2
    %v1004 = vadd.f32 %v1002, %v1003
    %v1005 = vrot.slane %v1004, 1
    %v1006 = vadd.f32 %v1004, %v1005
    %v1007 = vrot.slane %v999, 4
    %v1008 = vadd.f32 %v999, %v1007
    %v1009 = vrot.slane %v1008, 2
    %v1010 = vadd.f32 %v1008, %v1009
    %v1011 = vrot.slane %v1010, 1
    %v1012 = vadd.f32 %v1010, %v1011
    %v1013 = vmul.f32 %v1006, 0.125
    %v1014 = vmul.f32 %v1012, 0.125
    %v1015 = vmul.f32 %v959, %v959
    %v1016 = vmul.f32 %v999, %v999
    %v1017 = vrot.slane %v1015, 4
    %v1018 = vadd.f32 %v1015, %v1017
    %v1019 = vrot.slane %v1018, 2
    %v1020 = vadd.f32 %v1018, %v1019
    %v1021 = vrot.slane %v1020, 1
    %v1022 = vadd.f32 %v1020, %v1021
    %v1023 = vrot.slane %v1016, 4
    %v1024 = vadd.f32 %v1016, %v1023
    %v1025 = vrot.slane %v1024, 2
    %v1026 = vadd.f32 %v1024, %v1025
    %v1027 = vrot.slane %v1026, 1
    %v1028 = vadd.f32 %v1026, %v1027
    %v1029 = vmul.f32 %v1022, 0.125
    %v1030 = vmul.f32 %v1028, 0.125
    %v1031 = vmul.f32 %v1013, %v1013
    %v1032 = vmul.f32 %v1014, %v1014
    %v1033 = vsub.f32 %v1029, %v1031
    %v1034 = vsub.f32 %v1030, %v1032
    %v1035 = vsub.f32 %v959, %v1013
    %v1036 = vsub.f32 %v999, %v1014
    %v1037 = vadd.f32 %v1033, 1e-05
    %v1038 = vadd.f32 %v1034, 1e-05
    %v1039 = vrsqrt.pop %v1037
    %v1040 = vmul.f32 %v1039, %v1037
    %v1041 = vmul.f32 %v1040, %v1039
    %v1042 = vmul.f32 0.5, %v1041
    %v1043 = vsub.f32 1.5, %v1042
    %v1044 = vmul.f32 %v1039, %v1043
    %vm1045 = vweird.f32 %v1037
    %vm1046 = vweird.f32 %v1039
    %vm1047 = vmor %vm1045, %vm1046
    %v1048 = vsel %vm1047, %v1039, %v1044
    %v1049 = vrsqrt.pop %v1038
    %v1050 = vmul.f32 %v1049, %v1038
    %v1051 = vmul.f32 %v1050, %v1049
    %v1052 = vmul.f32 0.5, %v1051
    %v1053 = vsub.f32 1.5, %v1052
    %v1054 = vmul.f32 %v1049, %v1053
    %vm1055 = vweird.f32 %v1038
    %vm1056 = vweird.f32 %v1049
    %vm1057 = vmor %vm1055, %vm1056
    %v1058 = vsel %vm1057, %v1049, %v1054
    %v1059 = vmul.f32 %v1035, %v1048
    %v1060 = vmul.f32 %v1036, %v1058
    %v1061 = vmul.f32 %v1059, 0.2
    %v1062 = vmul.f32 %v1060, 0.2
    %v1063 = vmax.f32 %v1059, %v1061
    %v1064 = vmax.f32 %v1060, %v1062
    %v1065 = vld [vmem:[#allocation4 + $0x600] sm:$0xff]
    %v1066 = vld [vmem:[#allocation4 + $0x608] sm:$0xff]
    %v1067 = vld [vmem:[#allocation4 + $0x610] sm:$0xff]
    %v1068 = vld [vmem:[#allocation4 + $0x618] sm:$0xff]
    %v1069 = vld [vmem:[#allocation4 + $0x620] sm:$0xff]
    %v1070 = vld [vmem:[#allocation4 + $0x628] sm:$0xff]
    %v1071 = vld [vmem:[#allocation4 + $0x630] sm:$0xff]
    %v1072 = vld [vmem:[#allocation4 + $0x638] sm:$0xff]
    %v1073 = vld [vmem:[#allocation4 + $0x640] sm:$0xff]
    %v1074 = vld [vmem:[#allocation4 + $0x648] sm:$0xff]
    %v1075 = vld [vmem:[#allocation4 + $0x650] sm:$0xff]
    %v1076 = vld [vmem:[#allocation4 + $0x658] sm:$0xff]
    %v1077 = vld [vmem:[#allocation4 + $0x660] sm:$0xff]
    %v1078 = vld [vmem:[#allocation4 + $0x668] sm:$0xff]
    %v1079 = vld [vmem:[#allocation4 + $0x670] sm:$0xff]
    %v1080 = vld [vmem:[#allocation4 + $0x678] sm:$0xff]
    %v1081 = vld [vmem:[#allocation4 + $0x680] sm:$0xff]
    %v1082 = vld [vmem:[#allocation4 + $0x688] sm:$0xff]
    %v1083 = vld [vmem:[#allocation4 + $0x690] sm:$0xff]
    %v1084 = vld [vmem:[#allocation4 + $0x698] sm:$0xff]
    %v1085 = vld [vmem:[#allocation4 + $0x6a0] sm:$0xff]
    %v1086 = vld [vmem:[#allocation4 + $0x6a8] sm:$0xff]
    %v1087 = vld [vmem:[#allocation4 + $0x6b0] sm:$0xff]
    %v1088 = vld [vmem:[#allocation4 + $0x6b8] sm:$0xff]
    %v1089 = vld [vmem:[#allocation4 + $0x6c0] sm:$0xff]
    %v1090 = vld [vmem:[#allocation4 + $0x6c8] sm:$0xff]
    %v1091 = vld [vmem:[#allocation4 + $0x6d0] sm:$0xff]
    %v1092 = vld [vmem:[#allocation4 + $0x6d8] sm:$0xff]
    %v1093 = vld [vmem:[#allocation4 + $0x6e0] sm:$0xff]
    %v1094 = vld [vmem:[#allocation4 + $0x6e8] sm:$0xff]
    %v1095 = vld [vmem:[#allocation4 + $0x6f0] sm:$0xff]
    %v1096 = vld [vmem:[#allocation4 + $0x6f8] sm:$0xff]
    %v1097 = vld [vmem:[#allocation4 + $0x700] sm:$0xff]
    %v1098 = vld [vmem:[#allocation4 + $0x708] sm:$0xff]
    %v1099 = vld [vmem:[#allocation4 + $0x710] sm:$0xff]
    %v1100 = vld [vmem:[#allocation4 + $0x718] sm:$0xff]
    %v1101 = vld [vmem:[#allocation4 + $0x720] sm:$0xff]
    %v1102 = vld [vmem:[#allocation4 + $0x728] sm:$0xff]
    %v1103 = vld [vmem:[#allocation4 + $0x730] sm:$0xff]
    %v1104 = vld [vmem:[#allocation4 + $0x738] sm:$0xff]
    %v1105 = vld [vmem:[#allocation4 + $0x740] sm:$0xff]
    %v1106 = vld [vmem:[#allocation4 + $0x748] sm:$0xff]
    %v1107 = vld [vmem:[#allocation4 + $0x750] sm:$0xff]
    %v1108 = vld [vmem:[#allocation4 + $0x758] sm:$0xff]
    %v1109 = vld [vmem:[#allocation4 + $0x760] sm:$0xff]
    %v1110 = vld [vmem:[#allocation4 + $0x768] sm:$0xff]
    %v1111 = vld [vmem:[#allocation4 + $0x770] sm:$0xff]
    %v1112 = vld [vmem:[#allocation4 + $0x778] sm:$0xff]
    %v1113 = vld [vmem:[#allocation4 + $0x780] sm:$0xff]
    %v1114 = vld [vmem:[#allocation4 + $0x788] sm:$0xff]
    %v1115 = vld [vmem:[#allocation4 + $0x790] sm:$0xff]
    %v1116 = vld [vmem:[#allocation4 + $0x798] sm:$0xff]
    %v1117 = vld [vmem:[#allocation4 + $0x7a0] sm:$0xff]
    %v1118 = vld [vmem:[#allocation4 + $0x7a8] sm:$0xff]
    %v1119 = vld [vmem:[#allocation4 + $0x7b0] sm:$0xff]
    %v1120 = vld [vmem:[#allocation4 + $0x7b8] sm:$0xff]
    %v1121 = vld [vmem:[#allocation4 + $0x7c0] sm:$0xff]
    %v1122 = vld [vmem:[#allocation4 + $0x7c8] sm:$0xff]
    %v1123 = vld [vmem:[#allocation4 + $0x7d0] sm:$0xff]
    %v1124 = vld [vmem:[#allocation4 + $0x7d8] sm:$0xff]
    %v1125 = vld [vmem:[#allocation4 + $0x7e0] sm:$0xff]
    %v1126 = vld [vmem:[#allocation4 + $0x7e8] sm:$0xff]
    %v1127 = vld [vmem:[#allocation4 + $0x7f0] sm:$0xff]
    %v1128 = vld [vmem:[#allocation4 + $0x7f8] sm:$0xff]
    %1129 = vmatpush.msra.mxu0 %v1095
    %1130 = vmatpush.msra.mxu0 %v1093
    %1131 = vmatpush.msra.mxu0 %v1091
    %1132 = vmatpush.msra.mxu0 %v1089
    %1133 = vmatpush.msra.mxu0 %v1087
    %1134 = vmatpush.msra.mxu0 %v1085
    %1135 = vmatpush.msra.mxu0 %v1083
    %1136 = vmatpush.msra.mxu0 %v1081
    %1137 = vmatpush.msra.mxu0 %v1079
    %1138 = vmatpush.msra.mxu0 %v1077
    %1139 = vmatpush.msra.mxu0 %v1075
    %1140 = vmatpush.msra.mxu0 %v1073
    %1141 = vmatpush.msra.mxu0 %v1071
    %1142 = vmatpush.msra.mxu0 %v1069
    %1143 = vmatpush.msra.mxu0 %v1067
    %1144 = vmatpush.msra.mxu0 %v1065
    %1145 = vmatmul.f32.gmra.mxu0 %v1063
    %v1146 = vpop.f32.mrf.mxu0
    %v1147 = vadd.f32 0.0, %v1146
    %1148 = vdwg.mxu0
    %1149 = vmatpush.msra.mxu0 %v1127
    %1150 = vmatpush.msra.mxu0 %v1125
    %1151 = vmatpush.msra.mxu0 %v1123
    %1152 = vmatpush.msra.mxu0 %v1121
    %1153 = vmatpush.msra.mxu0 %v1119
    %1154 = vmatpush.msra.mxu0 %v1117
    %1155 = vmatpush.msra.mxu0 %v1115
    %1156 = vmatpush.msra.mxu0 %v1113
    %1157 = vmatpush.msra.mxu0 %v1111
    %1158 = vmatpush.msra.mxu0 %v1109
    %1159 = vmatpush.msra.mxu0 %v1107
    %1160 = vmatpush.msra.mxu0 %v1105
    %1161 = vmatpush.msra.mxu0 %v1103
    %1162 = vmatpush.msra.mxu0 %v1101
    %1163 = vmatpush.msra.mxu0 %v1099
    %1164 = vmatpush.msra.mxu0 %v1097
    %1165 = vmatmul.f32.gmra.mxu0 %v1064
    %v1166 = vpop.f32.mrf.mxu0
    %v1167 = vadd.f32 %v1147, %v1166
    %1168 = vdwg.mxu0
    %1169 = vmatpush.msra.mxu0 %v1096
    %1170 = vmatpush.msra.mxu0 %v1094
    %1171 = vmatpush.msra.mxu0 %v1092
    %1172 = vmatpush.msra.mxu0 %v1090
    %1173 = vmatpush.msra.mxu0 %v1088
    %1174 = vmatpush.msra.mxu0 %v1086
    %1175 = vmatpush.msra.mxu0 %v1084
    %1176 = vmatpush.msra.mxu0 %v1082
    %1177 = vmatpush.msra.mxu0 %v1080
    %1178 = vmatpush.msra.mxu0 %v1078
    %1179 = vmatpush.msra.mxu0 %v1076
    %1180 = vmatpush.msra.mxu0 %v1074
    %1181 = vmatpush.msra.mxu0 %v1072
    %1182 = vmatpush.msra.mxu0 %v1070
    %1183 = vmatpush.msra.mxu0 %v1068
    %1184 = vmatpush.msra.mxu0 %v1066
    %1185 = vmatmul.f32.gmra.mxu0 %v1063
    %v1186 = vpop.f32.mrf.mxu0
    %v1187 = vadd.f32 0.0, %v1186
    %1188 = vdwg.mxu0
    %1189 = vmatpush.msra.mxu0 %v1128
    %1190 = vmatpush.msra.mxu0 %v1126
    %1191 = vmatpush.msra.mxu0 %v1124
    %1192 = vmatpush.msra.mxu0 %v1122
    %1193 = vmatpush.msra.mxu0 %v1120
    %1194 = vmatpush.msra.mxu0 %v1118
    %1195 = vmatpush.msra.mxu0 %v1116
    %1196 = vmatpush.msra.mxu0 %v1114
    %1197 = vmatpush.msra.mxu0 %v1112
    %1198 = vmatpush.msra.mxu0 %v1110
    %1199 = vmatpush.msra.mxu0 %v1108
    %1200 = vmatpush.msra.mxu0 %v1106
    %1201 = vmatpush.msra.mxu0 %v1104
    %1202 = vmatpush.msra.mxu0 %v1102
    %1203 = vmatpush.msra.mxu0 %v1100
    %1204 = vmatpush.msra.mxu0 %v1098
    %1205 = vmatmul.f32.gmra.mxu0 %v1064
    %v1206 = vpop.f32.mrf.mxu0
    %v1207 = vadd.f32 %v1187, %v1206
    %1208 = vdwg.mxu0
    %v1209 = vrot.slane %v1167, 4
    %v1210 = vadd.f32 %v1167, %v1209
    %v1211 = vrot.slane %v1210, 2
    %v1212 = vadd.f32 %v1210, %v1211
    %v1213 = vrot.slane %v1212, 1
    %v1214 = vadd.f32 %v1212, %v1213
    %v1215 = vrot.slane %v1207, 4
    %v1216 = vadd.f32 %v1207, %v1215
    %v1217 = vrot.slane %v1216, 2
    %v1218 = vadd.f32 %v1216, %v1217
    %v1219 = vrot.slane %v1218, 1
    %v1220 = vadd.f32 %v1218, %v1219
    %v1221 = vmul.f32 %v1214, 0.125
    %v1222 = vmul.f32 %v1220, 0.125
    %v1223 = vmul.f32 %v1167, %v1167
    %v1224 = vmul.f32 %v1207, %v1207
    %v1225 = vrot.slane %v1223, 4
    %v1226 = vadd.f32 %v1223, %v1225
    %v1227 = vrot.slane %v1226, 2
    %v1228 = vadd.f32 %v1226, %v1227
    %v1229 = vrot.slane %v1228, 1
    %v1230 = vadd.f32 %v1228, %v1229
    %v1231 = vrot.slane %v1224, 4
    %v1232 = vadd.f32 %v1224, %v1231
    %v1233 = vrot.slane %v1232, 2
    %v1234 = vadd.f32 %v1232, %v1233
    %v1235 = vrot.slane %v1234, 1
    %v1236 = vadd.f32 %v1234, %v1235
    %v1237 = vmul.f32 %v1230, 0.125
    %v1238 = vmul.f32 %v1236, 0.125
    %v1239 = vmul.f32 %v1221, %v1221
    %v1240 = vmul.f32 %v1222, %v1222
    %v1241 = vsub.f32 %v1237, %v1239
    %v1242 = vsub.f32 %v1238, %v1240
    %v1243 = vsub.f32 %v1167, %v1221
    %v1244 = vsub.f32 %v1207, %v1222
    %v1245 = vadd.f32 %v1241, 1e-05
    %v1246 = vadd.f32 %v1242, 1e-05
    %v1247 = vrsqrt.pop %v1245
    %v1248 = vmul.f32 %v1247, %v1245
    %v1249 = vmul.f32 %v1248, %v1247
    %v1250 = vmul.f32 0.5, %v1249
    %v1251 = vsub.f32 1.5, %v1250
    %v1252 = vmul.f32 %v1247, %v1251
    %vm1253 = vweird.f32 %v1245
    %vm1254 = vweird.f32 %v1247
    %vm1255 = vmor %vm1253, %vm1254
    %v1256 = vsel %vm1255, %v1247, %v1252
    %v1257 = vrsqrt.pop %v1246
    %v1258 = vmul.f32 %v1257, %v1246
    %v1259 = vmul.f32 %v1258, %v1257
    %v1260 = vmul.f32 0.5, %v1259
    %v1261 = vsub.f32 1.5, %v1260
    %v1262 = vmul.f32 %v1257, %v1261
    %vm1263 = vweird.f32 %v1246
    %vm1264 = vweird.f32 %v1257
    %vm1265 = vmor %vm1263, %vm1264
    %v1266 = vsel %vm1265, %v1257, %v1262
    %v1267 = vmul.f32 %v1243, %v1256
    %v1268 = vmul.f32 %v1244, %v1266
    %v1269 = vmul.f32 %v1267, 0.2
    %v1270 = vmul.f32 %v1268, 0.2
    %v1271 = vmax.f32 %v1267, %v1269
    %v1272 = vmax.f32 %v1268, %v1270
    %v1273 = vld [vmem:[#allocation4 + $0x800] sm:$0xff]
    %v1274 = vld [vmem:[#allocation4 + $0x808] sm:$0xff]
    %v1275 = vld [vmem:[#allocation4 + $0x810] sm:$0xff]
    %v1276 = vld [vmem:[#allocation4 + $0x818] sm:$0xff]
    %v1277 = vld [vmem:[#allocation4 + $0x820] sm:$0xff]
    %v1278 = vld [vmem:[#allocation4 + $0x828] sm:$0xff]
    %v1279 = vld [vmem:[#allocation4 + $0x830] sm:$0xff]
    %v1280 = vld [vmem:[#allocation4 + $0x838] sm:$0xff]
    %v1281 = vld [vmem:[#allocation4 + $0x840] sm:$0xff]
    %v1282 = vld [vmem:[#allocation4 + $0x848] sm:$0xff]
    %v1283 = vld [vmem:[#allocation4 + $0x850] sm:$0xff]
    %v1284 = vld [vmem:[#allocation4 + $0x858] sm:$0xff]
    %v1285 = vld [vmem:[#allocation4 + $0x860] sm:$0xff]
    %v1286 = vld [vmem:[#allocation4 + $0x868] sm:$0xff]
    %v1287 = vld [vmem:[#allocation4 + $0x870] sm:$0xff]
    %v1288 = vld [vmem:[#allocation4 + $0x878] sm:$0xff]
    %v1289 = vld [vmem:[#allocation4 + $0x880] sm:$0xff]
    %v1290 = vld [vmem:[#allocation4 + $0x888] sm:$0xff]
    %v1291 = vld [vmem:[#allocation4 + $0x890] sm:$0xff]
    %v1292 = vld [vmem:[#allocation4 + $0x898] sm:$0xff]
    %v1293 = vld [vmem:[#allocation4 + $0x8a0] sm:$0xff]
    %v1294 = vld [vmem:[#allocation4 + $0x8a8] sm:$0xff]
    %v1295 = vld [vmem:[#allocation4 + $0x8b0] sm:$0xff]
    %v1296 = vld [vmem:[#allocation4 + $0x8b8] sm:$0xff]
    %v1297 = vld [vmem:[#allocation4 + $0x8c0] sm:$0xff]
    %v1298 = vld [vmem:[#allocation4 + $0x8c8] sm:$0xff]
    %v1299 = vld [vmem:[#allocation4 + $0x8d0] sm:$0xff]
    %v1300 = vld [vmem:[#allocation4 + $0x8d8] sm:$0xff]
    %v1301 = vld [vmem:[#allocation4 + $0x8e0] sm:$0xff]
    %v1302 = vld [vmem:[#allocation4 + $0x8e8] sm:$0xff]
    %v1303 = vld [vmem:[#allocation4 + $0x8f0] sm:$0xff]
    %v1304 = vld [vmem:[#allocation4 + $0x8f8] sm:$0xff]
    %v1305 = vld [vmem:[#allocation4 + $0x900] sm:$0xff]
    %v1306 = vld [vmem:[#allocation4 + $0x908] sm:$0xff]
    %v1307 = vld [vmem:[#allocation4 + $0x910] sm:$0xff]
    %v1308 = vld [vmem:[#allocation4 + $0x918] sm:$0xff]
    %v1309 = vld [vmem:[#allocation4 + $0x920] sm:$0xff]
    %v1310 = vld [vmem:[#allocation4 + $0x928] sm:$0xff]
    %v1311 = vld [vmem:[#allocation4 + $0x930] sm:$0xff]
    %v1312 = vld [vmem:[#allocation4 + $0x938] sm:$0xff]
    %v1313 = vld [vmem:[#allocation4 + $0x940] sm:$0xff]
    %v1314 = vld [vmem:[#allocation4 + $0x948] sm:$0xff]
    %v1315 = vld [vmem:[#allocation4 + $0x950] sm:$0xff]
    %v1316 = vld [vmem:[#allocation4 + $0x958] sm:$0xff]
    %v1317 = vld [vmem:[#allocation4 + $0x960] sm:$0xff]
    %v1318 = vld [vmem:[#allocation4 + $0x968] sm:$0xff]
    %v1319 = vld [vmem:[#allocation4 + $0x970] sm:$0xff]
    %v1320 = vld [vmem:[#allocation4 + $0x978] sm:$0xff]
    %v1321 = vld [vmem:[#allocation4 + $0x980] sm:$0xff]
    %v1322 = vld [vmem:[#allocation4 + $0x988] sm:$0xff]
    %v1323 = vld [vmem:[#allocation4 + $0x990] sm:$0xff]
    %v1324 = vld [vmem:[#allocation4 + $0x998] sm:$0xff]
    %v1325 = vld [vmem:[#allocation4 + $0x9a0] sm:$0xff]
    %v1326 = vld [vmem:[#allocation4 + $0x9a8] sm:$0xff]
    %v1327 = vld [vmem:[#allocation4 + $0x9b0] sm:$0xff]
    %v1328 = vld [vmem:[#allocation4 + $0x9b8] sm:$0xff]
    %v1329 = vld [vmem:[#allocation4 + $0x9c0] sm:$0xff]
    %v1330 = vld [vmem:[#allocation4 + $0x9c8] sm:$0xff]
    %v1331 = vld [vmem:[#allocation4 + $0x9d0] sm:$0xff]
    %v1332 = vld [vmem:[#allocation4 + $0x9d8] sm:$0xff]
    %v1333 = vld [vmem:[#allocation4 + $0x9e0] sm:$0xff]
    %v1334 = vld [vmem:[#allocation4 + $0x9e8] sm:$0xff]
    %v1335 = vld [vmem:[#allocation4 + $0x9f0] sm:$0xff]
    %v1336 = vld [vmem:[#allocation4 + $0x9f8] sm:$0xff]
    %1337 = vmatpush.msra.mxu0 %v1303
    %1338 = vmatpush.msra.mxu0 %v1301
    %1339 = vmatpush.msra.mxu0 %v1299
    %1340 = vmatpush.msra.mxu0 %v1297
    %1341 = vmatpush.msra.mxu0 %v1295
    %1342 = vmatpush.msra.mxu0 %v1293
    %1343 = vmatpush.msra.mxu0 %v1291
    %1344 = vmatpush.msra.mxu0 %v1289
    %1345 = vmatpush.msra.mxu0 %v1287
    %1346 = vmatpush.msra.mxu0 %v1285
    %1347 = vmatpush.msra.mxu0 %v1283
    %1348 = vmatpush.msra.mxu0 %v1281
    %1349 = vmatpush.msra.mxu0 %v1279
    %1350 = vmatpush.msra.mxu0 %v1277
    %1351 = vmatpush.msra.mxu0 %v1275
    %1352 = vmatpush.msra.mxu0 %v1273
    %1353 = vmatmul.f32.gmra.mxu0 %v1271
    %v1354 = vpop.f32.mrf.mxu0
    %v1355 = vadd.f32 0.0, %v1354
    %1356 = vdwg.mxu0
    %1357 = vmatpush.msra.mxu0 %v1335
    %1358 = vmatpush.msra.mxu0 %v1333
    %1359 = vmatpush.msra.mxu0 %v1331
    %1360 = vmatpush.msra.mxu0 %v1329
    %1361 = vmatpush.msra.mxu0 %v1327
    %1362 = vmatpush.msra.mxu0 %v1325
    %1363 = vmatpush.msra.mxu0 %v1323
    %1364 = vmatpush.msra.mxu0 %v1321
    %1365 = vmatpush.msra.mxu0 %v1319
    %1366 = vmatpush.msra.mxu0 %v1317
    %1367 = vmatpush.msra.mxu0 %v1315
    %1368 = vmatpush.msra.mxu0 %v1313
    %1369 = vmatpush.msra.mxu0 %v1311
    %1370 = vmatpush.msra.mxu0 %v1309
    %1371 = vmatpush.msra.mxu0 %v1307
    %1372 = vmatpush.msra.mxu0 %v1305
    %1373 = vmatmul.f32.gmra.mxu0 %v1272
    %v1374 = vpop.f32.mrf.mxu0
    %v1375 = vadd.f32 %v1355, %v1374
    %1376 = vdwg.mxu0
    %1377 = vmatpush.msra.mxu0 %v1304
    %1378 = vmatpush.msra.mxu0 %v1302
    %1379 = vmatpush.msra.mxu0 %v1300
    %1380 = vmatpush.msra.mxu0 %v1298
    %1381 = vmatpush.msra.mxu0 %v1296
    %1382 = vmatpush.msra.mxu0 %v1294
    %1383 = vmatpush.msra.mxu0 %v1292
    %1384 = vmatpush.msra.mxu0 %v1290
    %1385 = vmatpush.msra.mxu0 %v1288
    %1386 = vmatpush.msra.mxu0 %v1286
    %1387 = vmatpush.msra.mxu0 %v1284
    %1388 = vmatpush.msra.mxu0 %v1282
    %1389 = vmatpush.msra.mxu0 %v1280
    %1390 = vmatpush.msra.mxu0 %v1278
    %1391 = vmatpush.msra.mxu0 %v1276
    %1392 = vmatpush.msra.mxu0 %v1274
    %1393 = vmatmul.f32.gmra.mxu0 %v1271
    %v1394 = vpop.f32.mrf.mxu0
    %v1395 = vadd.f32 0.0, %v1394
    %1396 = vdwg.mxu0
    %1397 = vmatpush.msra.mxu0 %v1336
    %1398 = vmatpush.msra.mxu0 %v1334
    %1399 = vmatpush.msra.mxu0 %v1332
    %1400 = vmatpush.msra.mxu0 %v1330
    %1401 = vmatpush.msra.mxu0 %v1328
    %1402 = vmatpush.msra.mxu0 %v1326
    %1403 = vmatpush.msra.mxu0 %v1324
    %1404 = vmatpush.msra.mxu0 %v1322
    %1405 = vmatpush.msra.mxu0 %v1320
    %1406 = vmatpush.msra.mxu0 %v1318
    %1407 = vmatpush.msra.mxu0 %v1316
    %1408 = vmatpush.msra.mxu0 %v1314
    %1409 = vmatpush.msra.mxu0 %v1312
    %1410 = vmatpush.msra.mxu0 %v1310
    %1411 = vmatpush.msra.mxu0 %v1308
    %1412 = vmatpush.msra.mxu0 %v1306
    %1413 = vmatmul.f32.gmra.mxu0 %v1272
    %v1414 = vpop.f32.mrf.mxu0
    %v1415 = vadd.f32 %v1395, %v1414
    %1416 = vdwg.mxu0
    %v1417 = vrot.slane %v1375, 4
    %v1418 = vadd.f32 %v1375, %v1417
    %v1419 = vrot.slane %v1418, 2
    %v1420 = vadd.f32 %v1418, %v1419
    %v1421 = vrot.slane %v1420, 1
    %v1422 = vadd.f32 %v1420, %v1421
    %v1423 = vrot.slane %v1415, 4
    %v1424 = vadd.f32 %v1415, %v1423
    %v1425 = vrot.slane %v1424, 2
    %v1426 = vadd.f32 %v1424, %v1425
    %v1427 = vrot.slane %v1426, 1
    %v1428 = vadd.f32 %v1426, %v1427
    %v1429 = vmul.f32 %v1422, 0.125
    %v1430 = vmul.f32 %v1428, 0.125
    %v1431 = vmul.f32 %v1375, %v1375
    %v1432 = vmul.f32 %v1415, %v1415
    %v1433 = vrot.slane %v1431, 4
    %v1434 = vadd.f32 %v1431, %v1433
    %v1435 = vrot.slane %v1434, 2
    %v1436 = vadd.f32 %v1434, %v1435
    %v1437 = vrot.slane %v1436, 1
    %v1438 = vadd.f32 %v1436, %v1437
    %v1439 = vrot.slane %v1432, 4
    %v1440 = vadd.f32 %v1432, %v1439
    %v1441 = vrot.slane %v1440, 2
    %v1442 = vadd.f32 %v1440, %v1441
    %v1443 = vrot.slane %v1442, 1
    %v1444 = vadd.f32 %v1442, %v1443
    %v1445 = vmul.f32 %v1438, 0.125
    %v1446 = vmul.f32 %v1444, 0.125
    %v1447 = vmul.f32 %v1429, %v1429
    %v1448 = vmul.f32 %v1430, %v1430
    %v1449 = vsub.f32 %v1445, %v1447
    %v1450 = vsub.f32 %v1446, %v1448
    %v1451 = vsub.f32 %v1375, %v1429
    %v1452 = vsub.f32 %v1415, %v1430
    %v1453 = vadd.f32 %v1449, 1e-05
    %v1454 = vadd.f32 %v1450, 1e-05
    %v1455 = vrsqrt.pop %v1453
    %v1456 = vmul.f32 %v1455, %v1453
    %v1457 = vmul.f32 %v1456, %v1455
    %v1458 = vmul.f32 0.5, %v1457
    %v1459 = vsub.f32 1.5, %v1458
    %v1460 = vmul.f32 %v1455, %v1459
    %vm1461 = vweird.f32 %v1453
    %vm1462 = vweird.f32 %v1455
    %vm1463 = vmor %vm1461, %vm1462
    %v1464 = vsel %vm1463, %v1455, %v1460
    %v1465 = vrsqrt.pop %v1454
    %v1466 = vmul.f32 %v1465, %v1454
    %v1467 = vmul.f32 %v1466, %v1465
    %v1468 = vmul.f32 0.5, %v1467
    %v1469 = vsub.f32 1.5, %v1468
    %v1470 = vmul.f32 %v1465, %v1469
    %vm1471 = vweird.f32 %v1454
    %vm1472 = vweird.f32 %v1465
    %vm1473 = vmor %vm1471, %vm1472
    %v1474 = vsel %vm1473, %v1465, %v1470
    %v1475 = vmul.f32 %v1451, %v1464
    %v1476 = vmul.f32 %v1452, %v1474
    %v1477 = vmul.f32 %v1475, 0.2
    %v1478 = vmul.f32 %v1476, 0.2
    %v1479 = vmax.f32 %v1475, %v1477
    %v1480 = vmax.f32 %v1476, %v1478
    %v1481 = vld [vmem:[#allocation4 + $0xa00] sm:$0xff]
    %v1482 = vld [vmem:[#allocation4 + $0xa08] sm:$0xff]
    %v1483 = vld [vmem:[#allocation4 + $0xa10] sm:$0xff]
    %v1484 = vld [vmem:[#allocation4 + $0xa18] sm:$0xff]
    %v1485 = vld [vmem:[#allocation4 + $0xa20] sm:$0xff]
    %v1486 = vld [vmem:[#allocation4 + $0xa28] sm:$0xff]
    %v1487 = vld [vmem:[#allocation4 + $0xa30] sm:$0xff]
    %v1488 = vld [vmem:[#allocation4 + $0xa38] sm:$0xff]
    %v1489 = vld [vmem:[#allocation4 + $0xa40] sm:$0xff]
    %v1490 = vld [vmem:[#allocation4 + $0xa48] sm:$0xff]
    %v1491 = vld [vmem:[#allocation4 + $0xa50] sm:$0xff]
    %v1492 = vld [vmem:[#allocation4 + $0xa58] sm:$0xff]
    %v1493 = vld [vmem:[#allocation4 + $0xa60] sm:$0xff]
    %v1494 = vld [vmem:[#allocation4 + $0xa68] sm:$0xff]
    %v1495 = vld [vmem:[#allocation4 + $0xa70] sm:$0xff]
    %v1496 = vld [vmem:[#allocation4 + $0xa78] sm:$0xff]
    %v1497 = vld [vmem:[#allocation4 + $0xa80] sm:$0xff]
    %v1498 = vld [vmem:[#allocation4 + $0xa88] sm:$0xff]
    %v1499 = vld [vmem:[#allocation4 + $0xa90] sm:$0xff]
    %v1500 = vld [vmem:[#allocation4 + $0xa98] sm:$0xff]
    %v1501 = vld [vmem:[#allocation4 + $0xaa0] sm:$0xff]
    %v1502 = vld [vmem:[#allocation4 + $0xaa8] sm:$0xff]
    %v1503 = vld [vmem:[#allocation4 + $0xab0] sm:$0xff]
    %v1504 = vld [vmem:[#allocation4 + $0xab8] sm:$0xff]
    %v1505 = vld [vmem:[#allocation4 + $0xac0] sm:$0xff]
    %v1506 = vld [vmem:[#allocation4 + $0xac8] sm:$0xff]
    %v1507 = vld [vmem:[#allocation4 + $0xad0] sm:$0xff]
    %v1508 = vld [vmem:[#allocation4 + $0xad8] sm:$0xff]
    %v1509 = vld [vmem:[#allocation4 + $0xae0] sm:$0xff]
    %v1510 = vld [vmem:[#allocation4 + $0xae8] sm:$0xff]
    %v1511 = vld [vmem:[#allocation4 + $0xaf0] sm:$0xff]
    %v1512 = vld [vmem:[#allocation4 + $0xaf8] sm:$0xff]
    %v1513 = vld [vmem:[#allocation4 + $0xb00] sm:$0xff]
    %v1514 = vld [vmem:[#allocation4 + $0xb08] sm:$0xff]
    %v1515 = vld [vmem:[#allocation4 + $0xb10] sm:$0xff]
    %v1516 = vld [vmem:[#allocation4 + $0xb18] sm:$0xff]
    %v1517 = vld [vmem:[#allocation4 + $0xb20] sm:$0xff]
    %v1518 = vld [vmem:[#allocation4 + $0xb28] sm:$0xff]
    %v1519 = vld [vmem:[#allocation4 + $0xb30] sm:$0xff]
    %v1520 = vld [vmem:[#allocation4 + $0xb38] sm:$0xff]
    %v1521 = vld [vmem:[#allocation4 + $0xb40] sm:$0xff]
    %v1522 = vld [vmem:[#allocation4 + $0xb48] sm:$0xff]
    %v1523 = vld [vmem:[#allocation4 + $0xb50] sm:$0xff]
    %v1524 = vld [vmem:[#allocation4 + $0xb58] sm:$0xff]
    %v1525 = vld [vmem:[#allocation4 + $0xb60] sm:$0xff]
    %v1526 = vld [vmem:[#allocation4 + $0xb68] sm:$0xff]
    %v1527 = vld [vmem:[#allocation4 + $0xb70] sm:$0xff]
    %v1528 = vld [vmem:[#allocation4 + $0xb78] sm:$0xff]
    %v1529 = vld [vmem:[#allocation4 + $0xb80] sm:$0xff]
    %v1530 = vld [vmem:[#allocation4 + $0xb88] sm:$0xff]
    %v1531 = vld [vmem:[#allocation4 + $0xb90] sm:$0xff]
    %v1532 = vld [vmem:[#allocation4 + $0xb98] sm:$0xff]
    %v1533 = vld [vmem:[#allocation4 + $0xba0] sm:$0xff]
    %v1534 = vld [vmem:[#allocation4 + $0xba8] sm:$0xff]
    %v1535 = vld [vmem:[#allocation4 + $0xbb0] sm:$0xff]
    %v1536 = vld [vmem:[#allocation4 + $0xbb8] sm:$0xff]
    %v1537 = vld [vmem:[#allocation4 + $0xbc0] sm:$0xff]
    %v1538 = vld [vmem:[#allocation4 + $0xbc8] sm:$0xff]
    %v1539 = vld [vmem:[#allocation4 + $0xbd0] sm:$0xff]
    %v1540 = vld [vmem:[#allocation4 + $0xbd8] sm:$0xff]
    %v1541 = vld [vmem:[#allocation4 + $0xbe0] sm:$0xff]
    %v1542 = vld [vmem:[#allocation4 + $0xbe8] sm:$0xff]
    %v1543 = vld [vmem:[#allocation4 + $0xbf0] sm:$0xff]
    %v1544 = vld [vmem:[#allocation4 + $0xbf8] sm:$0xff]
    %s1545 = scalar_lea.vmem [#allocation6], 1
    %v1546 = vld [vmem:[%s1545] ss:$8 sm:$0x3]
    %v1548 = vperm.slane %v1546, 0
    %v1549 = vperm.slane %v1546, 1
    %1552 = vmatpush.msra.mxu0 %v1511
    %1553 = vmatpush.msra.mxu0 %v1509
    %1554 = vmatpush.msra.mxu0 %v1507
    %1555 = vmatpush.msra.mxu0 %v1505
    %1556 = vmatpush.msra.mxu0 %v1503
    %1557 = vmatpush.msra.mxu0 %v1501
    %1558 = vmatpush.msra.mxu0 %v1499
    %1559 = vmatpush.msra.mxu0 %v1497
    %1560 = vmatpush.msra.mxu0 %v1495
    %1561 = vmatpush.msra.mxu0 %v1493
    %1562 = vmatpush.msra.mxu0 %v1491
    %1563 = vmatpush.msra.mxu0 %v1489
    %1564 = vmatpush.msra.mxu0 %v1487
    %1565 = vmatpush.msra.mxu0 %v1485
    %1566 = vmatpush.msra.mxu0 %v1483
    %1567 = vmatpush.msra.mxu0 %v1481
    %1568 = vmatmul.f32.gmra.mxu0 %v1479
    %v1569 = vpop.f32.mrf.mxu0
    %v1570 = vadd.f32 %v1548, %v1569
    %1571 = vdwg.mxu0
    %1572 = vmatpush.msra.mxu0 %v1543
    %1573 = vmatpush.msra.mxu0 %v1541
    %1574 = vmatpush.msra.mxu0 %v1539
    %1575 = vmatpush.msra.mxu0 %v1537
    %1576 = vmatpush.msra.mxu0 %v1535
    %1577 = vmatpush.msra.mxu0 %v1533
    %1578 = vmatpush.msra.mxu0 %v1531
    %1579 = vmatpush.msra.mxu0 %v1529
    %1580 = vmatpush.msra.mxu0 %v1527
    %1581 = vmatpush.msra.mxu0 %v1525
    %1582 = vmatpush.msra.mxu0 %v1523
    %1583 = vmatpush.msra.mxu0 %v1521
    %1584 = vmatpush.msra.mxu0 %v1519
    %1585 = vmatpush.msra.mxu0 %v1517
    %1586 = vmatpush.msra.mxu0 %v1515
    %1587 = vmatpush.msra.mxu0 %v1513
    %1588 = vmatmul.f32.gmra.mxu0 %v1480
    %v1589 = vpop.f32.mrf.mxu0
    %v1590 = vadd.f32 %v1570, %v1589
    %1591 = vdwg.mxu0
    %1592 = vmatpush.msra.mxu0 %v1512
    %1593 = vmatpush.msra.mxu0 %v1510
    %1594 = vmatpush.msra.mxu0 %v1508
    %1595 = vmatpush.msra.mxu0 %v1506
    %1596 = vmatpush.msra.mxu0 %v1504
    %1597 = vmatpush.msra.mxu0 %v1502
    %1598 = vmatpush.msra.mxu0 %v1500
    %1599 = vmatpush.msra.mxu0 %v1498
    %1600 = vmatpush.msra.mxu0 %v1496
    %1601 = vmatpush.msra.mxu0 %v1494
    %1602 = vmatpush.msra.mxu0 %v1492
    %1603 = vmatpush.msra.mxu0 %v1490
    %1604 = vmatpush.msra.mxu0 %v1488
    %1605 = vmatpush.msra.mxu0 %v1486
    %1606 = vmatpush.msra.mxu0 %v1484
    %1607 = vmatpush.msra.mxu0 %v1482
    %1608 = vmatmul.f32.gmra.mxu0 %v1479
    %v1609 = vpop.f32.mrf.mxu0
    %v1610 = vadd.f32 %v1549, %v1609
    %1611 = vdwg.mxu0
    %1612 = vmatpush.msra.mxu0 %v1544
    %1613 = vmatpush.msra.mxu0 %v1542
    %1614 = vmatpush.msra.mxu0 %v1540
    %1615 = vmatpush.msra.mxu0 %v1538
    %1616 = vmatpush.msra.mxu0 %v1536
    %1617 = vmatpush.msra.mxu0 %v1534
    %1618 = vmatpush.msra.mxu0 %v1532
    %1619 = vmatpush.msra.mxu0 %v1530
    %1620 = vmatpush.msra.mxu0 %v1528
    %1621 = vmatpush.msra.mxu0 %v1526
    %1622 = vmatpush.msra.mxu0 %v1524
    %1623 = vmatpush.msra.mxu0 %v1522
    %1624 = vmatpush.msra.mxu0 %v1520
    %1625 = vmatpush.msra.mxu0 %v1518
    %1626 = vmatpush.msra.mxu0 %v1516
    %1627 = vmatpush.msra.mxu0 %v1514
    %1628 = vmatmul.f32.gmra.mxu0 %v1480
    %v1629 = vpop.f32.mrf.mxu0
    %v1630 = vadd.f32 %v1610, %v1629
    %1631 = vdwg.mxu0
    %v1632 = vadd.f32 %v438, %v1590
    %v1633 = vadd.f32 %v1632, %v1630
    %1634 = vst [vmem:[%s4] sm:$0xff] %v1633
    // Predicated region
    $region30: #{ae_forward.1} parent=1 // pred_check
      _
    $region31: #{ae_forward.1} parent=1 // pred_check_branch
      %1636 = sbr.rel (0) target = $region33
    $region32: #{ae_forward.1} parent=1 // pred_region
      _
    $region33: #{ae_forward.1} parent=1 // pred_fallthru
      _
    // Predicated region
    $region34: #{ae_forward.1} parent=1 // pred_check
      _
    $region35: #{ae_forward.1} parent=1 // pred_check_branch
      %1638 = sbr.rel (0) target = $region37
    $region36: #{ae_forward.1} parent=1 // pred_region
      _
    $region37: #{ae_forward.1} parent=1 // pred_fallthru
      _
    %1639 = vsyncpa [#allocation3], 1
    %1640 = vsyncpa [#allocation5], 1

</llo_original>
